<compile_context>
chip_gen: v6e
topology: v6e:2x2x1
jax: 0.10.0
libtpu: 0.0.40
codegen_flags: <defaults>
</compile_context>

<pallas_src>
import functools

import numpy as np

import jax
import jax.numpy as jnp
from jax.experimental import pallas as pl
from jax.experimental.pallas import tpu as pltpu


def bigru_kernel(enc_ref, wzr_e_ref, bzr_ref, wh_e_ref, bh_ref,
                 wzr_h_ref, whh_ref, wout_ref, bout_ref, out_ref, *,
                 seq_len, batch):
    """Single-invocation fused BiGRU forward (eval mode).

    enc_ref   : (S*B, 2E) bf16  row block t = [embed(t) | embed(S-1-t)]
    wzr_e_ref : (2E, 4H)  bf16  block-diag z/r encode weights, tiled over H
    bzr_ref   : (1, 4H)   f32   matching biases (tiled over H)
    wh_e_ref  : (2E, 2H)  bf16  block-diag candidate encode weights
    bh_ref    : (1, 2H)   f32
    wzr_h_ref : (2H, 4H)  f32   block-diag z/r hidden weights (tiled over H)
    whh_ref   : (2H, 2H)  f32   block-diag candidate hidden weights
    wout_ref  : (2H, Vp)  bf16  merged output projection (V padded to 128)
    bout_ref  : (1, Vp)   f32   padded columns = -1e30
    out_ref   : (S*B, Vp) f32   log-softmax output (lane-dense store)
    """
    S, B = seq_len, batch
    H2 = whh_ref.shape[0]          # 2H
    H = H2 // 2

    # ---- all encode-dependent gate terms (both directions) hoisted out of
    #      the serial recurrence: two small bf16 matmuls, f32 accumulation ----
    enc = enc_ref[...]
    pre_zr = (jnp.dot(enc, wzr_e_ref[...], preferred_element_type=jnp.float32)
              + bzr_ref[...])                       # (S*B, 4H)
    pre_h = (jnp.dot(enc, wh_e_ref[...], preferred_element_type=jnp.float32)
             + bh_ref[...])                         # (S*B, 2H)

    w_zr_h = wzr_h_ref[...]                         # loop-invariant loads
    w_hh = whh_ref[...]

    # ---- fused fwd+bwd recurrence; state & trajectory stay in vregs ----
    h_cat = jnp.zeros((B, H2), jnp.float32)         # [h1 | h2]
    states = [h_cat]                                # states[c] = h after c steps
    for t in range(S - 1):                          # S=8 -> keep fully unrolled
        p_zr = pre_zr[t * B:(t + 1) * B, :]         # aligned (B, 4H) row block
        p_h = pre_h[t * B:(t + 1) * B, :]           # aligned (B, 2H) row block
        g = jax.nn.sigmoid(
            jnp.dot(h_cat, w_zr_h, preferred_element_type=jnp.float32) + p_zr)
        z = g[:, :H2]                               # [z1 bcast H | z2 bcast H]
        r = g[:, H2:]                               # [r1 bcast H | r2 bcast H]
        h_tilde = jnp.tanh(
            jnp.dot(r * h_cat, w_hh, preferred_element_type=jnp.float32) + p_h)
        h_cat = h_cat + z * (h_tilde - h_cat)       # == (1-z)*h + z*h_tilde
        states.append(h_cat)

    # ---- assemble total_h: row s = [h1 after s steps | h2 after S-1-s steps].
    # Pure lane-select between two resident vregs (no cross-lane shuffle).
    lane = jax.lax.broadcasted_iota(jnp.int32, (B, H2), 1)
    is_fwd = lane < H
    rows = [jnp.where(is_fwd, states[s], states[S - 1 - s]) for s in range(S)]
    total_h = jnp.concatenate(rows, axis=0)         # (S*B, 2H), still in vregs

    # ---- single merged output projection + log-softmax, lane-dense store ----
    a = (jnp.dot(total_h.astype(wout_ref.dtype), wout_ref[...],
                 preferred_element_type=jnp.float32)
         + bout_ref[...])                           # (S*B, Vpad)
    m = jnp.max(a, axis=1, keepdims=True)
    lse = m + jnp.log(jnp.sum(jnp.exp(a - m), axis=1, keepdims=True))
    out_ref[...] = a - lse


@jax.jit
def bigru_forward(x, params):
    # Embedding gather (plain-JAX glue, mirrors the PyTorch indexing).
    encode = jnp.take(params["embeddings"], x, axis=0)      # (S, B, E) f32
    S, B, E = encode.shape
    H = params["w_h1"].shape[1]
    V = params["w_out"].shape[1]
    Vp = max(128, ((V + 127) // 128) * 128)                 # lane-dense output

    f32, bf16 = jnp.float32, jnp.bfloat16

    def split(w):            # (H+E, out): first H rows act on h, rest on step
        return w[:H, :], w[H:, :]

    wz1_h, wz1_e = split(params["w_z1"])
    wr1_h, wr1_e = split(params["w_r1"])
    wh1_h, wh1_e = split(params["w_h1"])
    wz2_h, wz2_e = split(params["w_z2"])
    wr2_h, wr2_e = split(params["w_r2"])
    wh2_h, wh2_e = split(params["w_h2"])

    zE = jnp.zeros((E, H), f32)
    zH = jnp.zeros((H, H), f32)

    def tile(w):             # (K,1) -> (K,H): fold the expand_as broadcast in
        return jnp.tile(w, (1, H))

    # Encode-side block-diagonal weights.  Column layout [z1|z2|r1|r2] (each
    # tiled across H lanes); rows 0:E act on embed(t), rows E:2E on embed(S-1-t).
    w_zr_e = jnp.concatenate([
        jnp.concatenate([tile(wz1_e), zE, tile(wr1_e), zE], axis=1),
        jnp.concatenate([zE, tile(wz2_e), zE, tile(wr2_e)], axis=1)], axis=0)
    b_zr = jnp.concatenate([tile(params["b_z1"]), tile(params["b_z2"]),
                            tile(params["b_r1"]), tile(params["b_r2"])], axis=1)

    w_h_e = jnp.concatenate([
        jnp.concatenate([wh1_e, zE], axis=1),
        jnp.concatenate([zE, wh2_e], axis=1)], axis=0)       # (2E, 2H)
    b_h = jnp.concatenate([params["b_h1"], params["b_h2"]], axis=1)

    # Hidden-side block-diagonal weights (kept f32: they sit on the serial chain).
    w_zr_h = jnp.concatenate([
        jnp.concatenate([tile(wz1_h), zH, tile(wr1_h), zH], axis=1),
        jnp.concatenate([zH, tile(wz2_h), zH, tile(wr2_h)], axis=1)], axis=0)
    w_hh = jnp.concatenate([
        jnp.concatenate([wh1_h, zH], axis=1),
        jnp.concatenate([zH, wh2_h], axis=1)], axis=0)       # (2H, 2H)

    # Merged output projection; V padded to a 128-lane multiple, padded logits
    # forced to -1e30 so max / logsumexp are unchanged.
    w_out = jnp.zeros((2 * H, Vp), f32).at[:, :V].set(params["w_out"])
    b_out = jnp.full((1, Vp), -1e30, f32).at[:, :V].set(params["b_out"])

    # Fused fwd/bwd encode input: row block t = [embed(t) | embed(S-1-t)].
    enc_cat = jnp.concatenate([encode, encode[::-1]],
                              axis=2).reshape(S * B, 2 * E)

    args = (enc_cat.astype(bf16), w_zr_e.astype(bf16), b_zr,
            w_h_e.astype(bf16), b_h, w_zr_h, w_hh,
            w_out.astype(bf16), b_out)

    kernel = functools.partial(bigru_kernel, seq_len=S, batch=B)
    logp = pl.pallas_call(
        kernel,
        out_shape=jax.ShapeDtypeStruct((S * B, Vp), jnp.float32),
        in_specs=[pl.BlockSpec(memory_space=pltpu.MemorySpace.VMEM)] * len(args),
        out_specs=pl.BlockSpec(memory_space=pltpu.MemorySpace.VMEM),
    )(*args)

    return logp[:, :V].reshape(S, B, V)


def make_params(key, vocab_size, hidden_size=8, embedding_size=32):
    E, H, V = embedding_size, hidden_size, vocab_size
    ks = jax.random.split(key, 16)

    def linear(kw, kb, fan_in, fan_out):
        bound = 1.0 / np.sqrt(fan_in)
        w = jax.random.uniform(kw, (fan_in, fan_out), jnp.float32, -bound, bound)
        b = jax.random.uniform(kb, (1, fan_out), jnp.float32, -bound, bound)
        return w, b

    p = {}
    p["embeddings"] = jax.random.normal(ks[0], (V, E), jnp.float32)
    p["w_z1"], p["b_z1"] = linear(ks[1], ks[2], E + H, 1)
    p["w_r1"], p["b_r1"] = linear(ks[3], ks[4], E + H, 1)
    p["w_h1"], p["b_h1"] = linear(ks[5], ks[6], E + H, H)
    p["w_z2"], p["b_z2"] = linear(ks[7], ks[8], E + H, 1)
    p["w_r2"], p["b_r2"] = linear(ks[9], ks[10], E + H, 1)
    p["w_h2"], p["b_h2"] = linear(ks[11], ks[12], E + H, H)
    p["w_out"], p["b_out"] = linear(ks[13], ks[14], 2 * H, V)
    return p


def bigru_reference(x, params):
    """Pure-JAX re-implementation of the PyTorch forward (eval mode)."""
    encode = params["embeddings"][x]
    S, B, _ = encode.shape
    H = params["w_h1"].shape[1]

    def step_fn(h, step, wz, bz, wr, br, wh, bh):
        hs = jnp.concatenate([h, step], axis=1)
        z = jax.nn.sigmoid(hs @ wz + bz)
        r = jax.nn.sigmoid(hs @ wr + br)
        h_t = jnp.tanh(jnp.concatenate([r * h, step], axis=1) @ wh + bh)
        return (1.0 - z) * h + z * h_t

    h = jnp.zeros((B, H), jnp.float32)
    th1 = [h]
    for t in range(S - 1):
        h = step_fn(h, encode[t], params["w_z1"], params["b_z1"],
                    params["w_r1"], params["b_r1"], params["w_h1"], params["b_h1"])
        th1.append(h)
    th1 = jnp.stack(th1)

    h = jnp.zeros((B, H), jnp.float32)
    th2 = [h]
    for t in range(S - 1):
        idx = S - 1 - t
        h = step_fn(h, encode[idx], params["w_z2"], params["b_z2"],
                    params["w_r2"], params["b_r2"], params["w_h2"], params["b_h2"])
        th2.append(h)
    th2 = jnp.stack(th2[::-1])

    th = jnp.concatenate([th1, th2], axis=2)
    a = jnp.einsum("sbk,kv->sbv", th, params["w_out"]) + params["b_out"]
    m = jnp.max(a, axis=2, keepdims=True)
    return a - (m + jnp.log(jnp.sum(jnp.exp(a - m), axis=2, keepdims=True)))


if __name__ == "__main__":
    vocab_size, hidden_size, embedding_size = 32, 8, 32
    seq_len, batch = 8, 8     # batch=8 keeps per-step row blocks sublane-aligned

    key = jax.random.PRNGKey(0)
    kp, kx = jax.random.split(key)
    params = make_params(kp, vocab_size, hidden_size, embedding_size)
    x = jax.random.randint(kx, (seq_len, batch), 0, vocab_size, dtype=jnp.int32)

    out = bigru_forward(x, params)
    out = jax.block_until_ready(out)

    assert out.shape == (seq_len, batch, vocab_size)
    ref = bigru_reference(x, params)
    np.testing.assert_allclose(np.asarray(out), np.asarray(ref), rtol=2e-2, atol=2e-2)

    print("KERNEL_OK")
</pallas_src>

<mosaic_0001>
module attributes {stable_mosaic.version = 11 : i64} {
  func.func @bigru_kernel(%arg0: memref<64x64xbf16, #tpu.memory_space<vmem>>, %arg1: memref<64x32xbf16, #tpu.memory_space<vmem>>, %arg2: memref<1x32xf32, #tpu.memory_space<vmem>>, %arg3: memref<64x16xbf16, #tpu.memory_space<vmem>>, %arg4: memref<1x16xf32, #tpu.memory_space<vmem>>, %arg5: memref<16x32xf32, #tpu.memory_space<vmem>>, %arg6: memref<16x16xf32, #tpu.memory_space<vmem>>, %arg7: memref<16x128xbf16, #tpu.memory_space<vmem>>, %arg8: memref<1x128xf32, #tpu.memory_space<vmem>>, %arg9: memref<64x128xf32, #tpu.memory_space<vmem>>) attributes {dimension_semantics = [], scalar_prefetch = 0 : i64, scratch_operands = 0 : i64, tpu.core_type = #tpu.core_type<tc>} {
    %c0 = arith.constant 0 : index
    %c0_0 = arith.constant 0 : index
    %0 = vector.load %arg0[%c0, %c0_0] : memref<64x64xbf16, #tpu.memory_space<vmem>>, vector<64x64xbf16>
    %c0_1 = arith.constant 0 : index
    %c0_2 = arith.constant 0 : index
    %1 = vector.load %arg1[%c0_1, %c0_2] : memref<64x32xbf16, #tpu.memory_space<vmem>>, vector<64x32xbf16>
    %cst = arith.constant dense<0.000000e+00> : vector<64x32xf32>
    %2 = tpu.matmul %0, %1, %cst {dimension_numbers = #tpu.dot_dimension_numbers<[1], [0], [0], [1], [0, 0, 1, 1], [], []>} : vector<64x64xbf16>, vector<64x32xbf16>, vector<64x32xf32> -> vector<64x32xf32>
    %c0_3 = arith.constant 0 : index
    %c0_4 = arith.constant 0 : index
    %3 = vector.load %arg2[%c0_3, %c0_4] : memref<1x32xf32, #tpu.memory_space<vmem>>, vector<1x32xf32>
    %4 = vector.broadcast %3 : vector<1x32xf32> to vector<64x32xf32>
    %5 = arith.addf %2, %4 : vector<64x32xf32>
    %c0_5 = arith.constant 0 : index
    %c0_6 = arith.constant 0 : index
    %6 = vector.load %arg3[%c0_5, %c0_6] : memref<64x16xbf16, #tpu.memory_space<vmem>>, vector<64x16xbf16>
    %cst_7 = arith.constant dense<0.000000e+00> : vector<64x16xf32>
    %7 = tpu.matmul %0, %6, %cst_7 {dimension_numbers = #tpu.dot_dimension_numbers<[1], [0], [0], [1], [0, 0, 1, 1], [], []>} : vector<64x64xbf16>, vector<64x16xbf16>, vector<64x16xf32> -> vector<64x16xf32>
    %c0_8 = arith.constant 0 : index
    %c0_9 = arith.constant 0 : index
    %8 = vector.load %arg4[%c0_8, %c0_9] : memref<1x16xf32, #tpu.memory_space<vmem>>, vector<1x16xf32>
    %9 = vector.broadcast %8 : vector<1x16xf32> to vector<64x16xf32>
    %10 = arith.addf %7, %9 : vector<64x16xf32>
    %c0_10 = arith.constant 0 : index
    %c0_11 = arith.constant 0 : index
    %11 = vector.load %arg5[%c0_10, %c0_11] : memref<16x32xf32, #tpu.memory_space<vmem>>, vector<16x32xf32>
    %c0_12 = arith.constant 0 : index
    %c0_13 = arith.constant 0 : index
    %12 = vector.load %arg6[%c0_12, %c0_13] : memref<16x16xf32, #tpu.memory_space<vmem>>, vector<16x16xf32>
    %cst_14 = arith.constant 0.000000e+00 : f32
    %13 = vector.broadcast %cst_14 : f32 to vector<8x16xf32>
    %14 = vector.extract_strided_slice %5 {offsets = [0, 0], sizes = [8, 32], strides = [1, 1]} : vector<64x32xf32> to vector<8x32xf32>
    %15 = vector.extract_strided_slice %10 {offsets = [0, 0], sizes = [8, 16], strides = [1, 1]} : vector<64x16xf32> to vector<8x16xf32>
    %cst_15 = arith.constant dense<0.000000e+00> : vector<8x32xf32>
    %16 = tpu.matmul %13, %11, %cst_15 {dimension_numbers = #tpu.dot_dimension_numbers<[1], [0], [0], [1], [0, 0, 1, 1], [], []>} : vector<8x16xf32>, vector<16x32xf32>, vector<8x32xf32> -> vector<8x32xf32>
    %17 = arith.addf %16, %14 : vector<8x32xf32>
    %18 = arith.negf %17 : vector<8x32xf32>
    %19 = math.exp %18 : vector<8x32xf32>
    %cst_16 = arith.constant 1.000000e+00 : f32
    %20 = vector.broadcast %cst_16 : f32 to vector<8x32xf32>
    %21 = arith.addf %20, %19 : vector<8x32xf32>
    %22 = arith.divf %20, %21 : vector<8x32xf32>
    %23 = vector.extract_strided_slice %22 {offsets = [0, 0], sizes = [8, 16], strides = [1, 1]} : vector<8x32xf32> to vector<8x16xf32>
    %24 = vector.extract_strided_slice %22 {offsets = [0, 16], sizes = [8, 16], strides = [1, 1]} : vector<8x32xf32> to vector<8x16xf32>
    %25 = arith.mulf %24, %13 : vector<8x16xf32>
    %cst_17 = arith.constant dense<0.000000e+00> : vector<8x16xf32>
    %26 = tpu.matmul %25, %12, %cst_17 {dimension_numbers = #tpu.dot_dimension_numbers<[1], [0], [0], [1], [0, 0, 1, 1], [], []>} : vector<8x16xf32>, vector<16x16xf32>, vector<8x16xf32> -> vector<8x16xf32>
    %27 = arith.addf %26, %15 : vector<8x16xf32>
    %28 = math.tanh %27 : vector<8x16xf32>
    %29 = arith.subf %28, %13 : vector<8x16xf32>
    %30 = arith.mulf %23, %29 : vector<8x16xf32>
    %31 = arith.addf %13, %30 : vector<8x16xf32>
    %32 = vector.extract_strided_slice %5 {offsets = [8, 0], sizes = [8, 32], strides = [1, 1]} : vector<64x32xf32> to vector<8x32xf32>
    %33 = vector.extract_strided_slice %10 {offsets = [8, 0], sizes = [8, 16], strides = [1, 1]} : vector<64x16xf32> to vector<8x16xf32>
    %cst_18 = arith.constant dense<0.000000e+00> : vector<8x32xf32>
    %34 = tpu.matmul %31, %11, %cst_18 {dimension_numbers = #tpu.dot_dimension_numbers<[1], [0], [0], [1], [0, 0, 1, 1], [], []>} : vector<8x16xf32>, vector<16x32xf32>, vector<8x32xf32> -> vector<8x32xf32>
    %35 = arith.addf %34, %32 : vector<8x32xf32>
    %36 = arith.negf %35 : vector<8x32xf32>
    %37 = math.exp %36 : vector<8x32xf32>
    %cst_19 = arith.constant 1.000000e+00 : f32
    %38 = vector.broadcast %cst_19 : f32 to vector<8x32xf32>
    %39 = arith.addf %38, %37 : vector<8x32xf32>
    %40 = arith.divf %38, %39 : vector<8x32xf32>
    %41 = vector.extract_strided_slice %40 {offsets = [0, 0], sizes = [8, 16], strides = [1, 1]} : vector<8x32xf32> to vector<8x16xf32>
    %42 = vector.extract_strided_slice %40 {offsets = [0, 16], sizes = [8, 16], strides = [1, 1]} : vector<8x32xf32> to vector<8x16xf32>
    %43 = arith.mulf %42, %31 : vector<8x16xf32>
    %cst_20 = arith.constant dense<0.000000e+00> : vector<8x16xf32>
    %44 = tpu.matmul %43, %12, %cst_20 {dimension_numbers = #tpu.dot_dimension_numbers<[1], [0], [0], [1], [0, 0, 1, 1], [], []>} : vector<8x16xf32>, vector<16x16xf32>, vector<8x16xf32> -> vector<8x16xf32>
    %45 = arith.addf %44, %33 : vector<8x16xf32>
    %46 = math.tanh %45 : vector<8x16xf32>
    %47 = arith.subf %46, %31 : vector<8x16xf32>
    %48 = arith.mulf %41, %47 : vector<8x16xf32>
    %49 = arith.addf %31, %48 : vector<8x16xf32>
    %50 = vector.extract_strided_slice %5 {offsets = [16, 0], sizes = [8, 32], strides = [1, 1]} : vector<64x32xf32> to vector<8x32xf32>
    %51 = vector.extract_strided_slice %10 {offsets = [16, 0], sizes = [8, 16], strides = [1, 1]} : vector<64x16xf32> to vector<8x16xf32>
    %cst_21 = arith.constant dense<0.000000e+00> : vector<8x32xf32>
    %52 = tpu.matmul %49, %11, %cst_21 {dimension_numbers = #tpu.dot_dimension_numbers<[1], [0], [0], [1], [0, 0, 1, 1], [], []>} : vector<8x16xf32>, vector<16x32xf32>, vector<8x32xf32> -> vector<8x32xf32>
    %53 = arith.addf %52, %50 : vector<8x32xf32>
    %54 = arith.negf %53 : vector<8x32xf32>
    %55 = math.exp %54 : vector<8x32xf32>
    %cst_22 = arith.constant 1.000000e+00 : f32
    %56 = vector.broadcast %cst_22 : f32 to vector<8x32xf32>
    %57 = arith.addf %56, %55 : vector<8x32xf32>
    %58 = arith.divf %56, %57 : vector<8x32xf32>
    %59 = vector.extract_strided_slice %58 {offsets = [0, 0], sizes = [8, 16], strides = [1, 1]} : vector<8x32xf32> to vector<8x16xf32>
    %60 = vector.extract_strided_slice %58 {offsets = [0, 16], sizes = [8, 16], strides = [1, 1]} : vector<8x32xf32> to vector<8x16xf32>
    %61 = arith.mulf %60, %49 : vector<8x16xf32>
    %cst_23 = arith.constant dense<0.000000e+00> : vector<8x16xf32>
    %62 = tpu.matmul %61, %12, %cst_23 {dimension_numbers = #tpu.dot_dimension_numbers<[1], [0], [0], [1], [0, 0, 1, 1], [], []>} : vector<8x16xf32>, vector<16x16xf32>, vector<8x16xf32> -> vector<8x16xf32>
    %63 = arith.addf %62, %51 : vector<8x16xf32>
    %64 = math.tanh %63 : vector<8x16xf32>
    %65 = arith.subf %64, %49 : vector<8x16xf32>
    %66 = arith.mulf %59, %65 : vector<8x16xf32>
    %67 = arith.addf %49, %66 : vector<8x16xf32>
    %68 = vector.extract_strided_slice %5 {offsets = [24, 0], sizes = [8, 32], strides = [1, 1]} : vector<64x32xf32> to vector<8x32xf32>
    %69 = vector.extract_strided_slice %10 {offsets = [24, 0], sizes = [8, 16], strides = [1, 1]} : vector<64x16xf32> to vector<8x16xf32>
    %cst_24 = arith.constant dense<0.000000e+00> : vector<8x32xf32>
    %70 = tpu.matmul %67, %11, %cst_24 {dimension_numbers = #tpu.dot_dimension_numbers<[1], [0], [0], [1], [0, 0, 1, 1], [], []>} : vector<8x16xf32>, vector<16x32xf32>, vector<8x32xf32> -> vector<8x32xf32>
    %71 = arith.addf %70, %68 : vector<8x32xf32>
    %72 = arith.negf %71 : vector<8x32xf32>
    %73 = math.exp %72 : vector<8x32xf32>
    %cst_25 = arith.constant 1.000000e+00 : f32
    %74 = vector.broadcast %cst_25 : f32 to vector<8x32xf32>
    %75 = arith.addf %74, %73 : vector<8x32xf32>
    %76 = arith.divf %74, %75 : vector<8x32xf32>
    %77 = vector.extract_strided_slice %76 {offsets = [0, 0], sizes = [8, 16], strides = [1, 1]} : vector<8x32xf32> to vector<8x16xf32>
    %78 = vector.extract_strided_slice %76 {offsets = [0, 16], sizes = [8, 16], strides = [1, 1]} : vector<8x32xf32> to vector<8x16xf32>
    %79 = arith.mulf %78, %67 : vector<8x16xf32>
    %cst_26 = arith.constant dense<0.000000e+00> : vector<8x16xf32>
    %80 = tpu.matmul %79, %12, %cst_26 {dimension_numbers = #tpu.dot_dimension_numbers<[1], [0], [0], [1], [0, 0, 1, 1], [], []>} : vector<8x16xf32>, vector<16x16xf32>, vector<8x16xf32> -> vector<8x16xf32>
    %81 = arith.addf %80, %69 : vector<8x16xf32>
    %82 = math.tanh %81 : vector<8x16xf32>
    %83 = arith.subf %82, %67 : vector<8x16xf32>
    %84 = arith.mulf %77, %83 : vector<8x16xf32>
    %85 = arith.addf %67, %84 : vector<8x16xf32>
    %86 = vector.extract_strided_slice %5 {offsets = [32, 0], sizes = [8, 32], strides = [1, 1]} : vector<64x32xf32> to vector<8x32xf32>
    %87 = vector.extract_strided_slice %10 {offsets = [32, 0], sizes = [8, 16], strides = [1, 1]} : vector<64x16xf32> to vector<8x16xf32>
    %cst_27 = arith.constant dense<0.000000e+00> : vector<8x32xf32>
    %88 = tpu.matmul %85, %11, %cst_27 {dimension_numbers = #tpu.dot_dimension_numbers<[1], [0], [0], [1], [0, 0, 1, 1], [], []>} : vector<8x16xf32>, vector<16x32xf32>, vector<8x32xf32> -> vector<8x32xf32>
    %89 = arith.addf %88, %86 : vector<8x32xf32>
    %90 = arith.negf %89 : vector<8x32xf32>
    %91 = math.exp %90 : vector<8x32xf32>
    %cst_28 = arith.constant 1.000000e+00 : f32
    %92 = vector.broadcast %cst_28 : f32 to vector<8x32xf32>
    %93 = arith.addf %92, %91 : vector<8x32xf32>
    %94 = arith.divf %92, %93 : vector<8x32xf32>
    %95 = vector.extract_strided_slice %94 {offsets = [0, 0], sizes = [8, 16], strides = [1, 1]} : vector<8x32xf32> to vector<8x16xf32>
    %96 = vector.extract_strided_slice %94 {offsets = [0, 16], sizes = [8, 16], strides = [1, 1]} : vector<8x32xf32> to vector<8x16xf32>
    %97 = arith.mulf %96, %85 : vector<8x16xf32>
    %cst_29 = arith.constant dense<0.000000e+00> : vector<8x16xf32>
    %98 = tpu.matmul %97, %12, %cst_29 {dimension_numbers = #tpu.dot_dimension_numbers<[1], [0], [0], [1], [0, 0, 1, 1], [], []>} : vector<8x16xf32>, vector<16x16xf32>, vector<8x16xf32> -> vector<8x16xf32>
    %99 = arith.addf %98, %87 : vector<8x16xf32>
    %100 = math.tanh %99 : vector<8x16xf32>
    %101 = arith.subf %100, %85 : vector<8x16xf32>
    %102 = arith.mulf %95, %101 : vector<8x16xf32>
    %103 = arith.addf %85, %102 : vector<8x16xf32>
    %104 = vector.extract_strided_slice %5 {offsets = [40, 0], sizes = [8, 32], strides = [1, 1]} : vector<64x32xf32> to vector<8x32xf32>
    %105 = vector.extract_strided_slice %10 {offsets = [40, 0], sizes = [8, 16], strides = [1, 1]} : vector<64x16xf32> to vector<8x16xf32>
    %cst_30 = arith.constant dense<0.000000e+00> : vector<8x32xf32>
    %106 = tpu.matmul %103, %11, %cst_30 {dimension_numbers = #tpu.dot_dimension_numbers<[1], [0], [0], [1], [0, 0, 1, 1], [], []>} : vector<8x16xf32>, vector<16x32xf32>, vector<8x32xf32> -> vector<8x32xf32>
    %107 = arith.addf %106, %104 : vector<8x32xf32>
    %108 = arith.negf %107 : vector<8x32xf32>
    %109 = math.exp %108 : vector<8x32xf32>
    %cst_31 = arith.constant 1.000000e+00 : f32
    %110 = vector.broadcast %cst_31 : f32 to vector<8x32xf32>
    %111 = arith.addf %110, %109 : vector<8x32xf32>
    %112 = arith.divf %110, %111 : vector<8x32xf32>
    %113 = vector.extract_strided_slice %112 {offsets = [0, 0], sizes = [8, 16], strides = [1, 1]} : vector<8x32xf32> to vector<8x16xf32>
    %114 = vector.extract_strided_slice %112 {offsets = [0, 16], sizes = [8, 16], strides = [1, 1]} : vector<8x32xf32> to vector<8x16xf32>
    %115 = arith.mulf %114, %103 : vector<8x16xf32>
    %cst_32 = arith.constant dense<0.000000e+00> : vector<8x16xf32>
    %116 = tpu.matmul %115, %12, %cst_32 {dimension_numbers = #tpu.dot_dimension_numbers<[1], [0], [0], [1], [0, 0, 1, 1], [], []>} : vector<8x16xf32>, vector<16x16xf32>, vector<8x16xf32> -> vector<8x16xf32>
    %117 = arith.addf %116, %105 : vector<8x16xf32>
    %118 = math.tanh %117 : vector<8x16xf32>
    %119 = arith.subf %118, %103 : vector<8x16xf32>
    %120 = arith.mulf %113, %119 : vector<8x16xf32>
    %121 = arith.addf %103, %120 : vector<8x16xf32>
    %122 = vector.extract_strided_slice %5 {offsets = [48, 0], sizes = [8, 32], strides = [1, 1]} : vector<64x32xf32> to vector<8x32xf32>
    %123 = vector.extract_strided_slice %10 {offsets = [48, 0], sizes = [8, 16], strides = [1, 1]} : vector<64x16xf32> to vector<8x16xf32>
    %cst_33 = arith.constant dense<0.000000e+00> : vector<8x32xf32>
    %124 = tpu.matmul %121, %11, %cst_33 {dimension_numbers = #tpu.dot_dimension_numbers<[1], [0], [0], [1], [0, 0, 1, 1], [], []>} : vector<8x16xf32>, vector<16x32xf32>, vector<8x32xf32> -> vector<8x32xf32>
    %125 = arith.addf %124, %122 : vector<8x32xf32>
    %126 = arith.negf %125 : vector<8x32xf32>
    %127 = math.exp %126 : vector<8x32xf32>
    %cst_34 = arith.constant 1.000000e+00 : f32
    %128 = vector.broadcast %cst_34 : f32 to vector<8x32xf32>
    %129 = arith.addf %128, %127 : vector<8x32xf32>
    %130 = arith.divf %128, %129 : vector<8x32xf32>
    %131 = vector.extract_strided_slice %130 {offsets = [0, 0], sizes = [8, 16], strides = [1, 1]} : vector<8x32xf32> to vector<8x16xf32>
    %132 = vector.extract_strided_slice %130 {offsets = [0, 16], sizes = [8, 16], strides = [1, 1]} : vector<8x32xf32> to vector<8x16xf32>
    %133 = arith.mulf %132, %121 : vector<8x16xf32>
    %cst_35 = arith.constant dense<0.000000e+00> : vector<8x16xf32>
    %134 = tpu.matmul %133, %12, %cst_35 {dimension_numbers = #tpu.dot_dimension_numbers<[1], [0], [0], [1], [0, 0, 1, 1], [], []>} : vector<8x16xf32>, vector<16x16xf32>, vector<8x16xf32> -> vector<8x16xf32>
    %135 = arith.addf %134, %123 : vector<8x16xf32>
    %136 = math.tanh %135 : vector<8x16xf32>
    %137 = arith.subf %136, %121 : vector<8x16xf32>
    %138 = arith.mulf %131, %137 : vector<8x16xf32>
    %139 = arith.addf %121, %138 : vector<8x16xf32>
    %140 = tpu.iota {dimensions = array<i32: 1>} : vector<8x16xi32>
    %c8_i32 = arith.constant 8 : i32
    %141 = vector.broadcast %c8_i32 : i32 to vector<8x16xi32>
    %142 = arith.cmpi slt, %140, %141 : vector<8x16xi32>
    %143 = arith.select %142, %13, %139 : vector<8x16xi1>, vector<8x16xf32>
    %144 = arith.select %142, %31, %121 : vector<8x16xi1>, vector<8x16xf32>
    %145 = arith.select %142, %49, %103 : vector<8x16xi1>, vector<8x16xf32>
    %146 = arith.select %142, %67, %85 : vector<8x16xi1>, vector<8x16xf32>
    %147 = arith.select %142, %85, %67 : vector<8x16xi1>, vector<8x16xf32>
    %148 = arith.select %142, %103, %49 : vector<8x16xi1>, vector<8x16xf32>
    %149 = arith.select %142, %121, %31 : vector<8x16xi1>, vector<8x16xf32>
    %150 = arith.select %142, %139, %13 : vector<8x16xi1>, vector<8x16xf32>
    %151 = tpu.concatenate %143, %144, %145, %146, %147, %148, %149, %150 in 0 : vector<8x16xf32>, vector<8x16xf32>, vector<8x16xf32>, vector<8x16xf32>, vector<8x16xf32>, vector<8x16xf32>, vector<8x16xf32>, vector<8x16xf32> -> vector<64x16xf32>
    %152 = arith.truncf %151 : vector<64x16xf32> to vector<64x16xbf16>
    %c0_36 = arith.constant 0 : index
    %c0_37 = arith.constant 0 : index
    %153 = vector.load %arg7[%c0_36, %c0_37] : memref<16x128xbf16, #tpu.memory_space<vmem>>, vector<16x128xbf16>
    %cst_38 = arith.constant dense<0.000000e+00> : vector<64x128xf32>
    %154 = tpu.matmul %152, %153, %cst_38 {dimension_numbers = #tpu.dot_dimension_numbers<[1], [0], [0], [1], [0, 0, 1, 1], [], []>} : vector<64x16xbf16>, vector<16x128xbf16>, vector<64x128xf32> -> vector<64x128xf32>
    %c0_39 = arith.constant 0 : index
    %c0_40 = arith.constant 0 : index
    %155 = vector.load %arg8[%c0_39, %c0_40] : memref<1x128xf32, #tpu.memory_space<vmem>>, vector<1x128xf32>
    %156 = vector.broadcast %155 : vector<1x128xf32> to vector<64x128xf32>
    %157 = arith.addf %154, %156 : vector<64x128xf32>
    %cst_41 = arith.constant dense<0xFF800000> : vector<64xf32>
    %158 = vector.multi_reduction <maximumf>, %157, %cst_41 [1] : vector<64x128xf32> to vector<64xf32>
    %159 = vector.shape_cast %158 : vector<64xf32> to vector<64x1xf32>
    %160 = vector.broadcast %159 : vector<64x1xf32> to vector<64x128xf32>
    %161 = arith.subf %157, %160 : vector<64x128xf32>
    %162 = math.exp %161 : vector<64x128xf32>
    %cst_42 = arith.constant dense<0.000000e+00> : vector<64xf32>
    %163 = vector.multi_reduction <add>, %162, %cst_42 [1] : vector<64x128xf32> to vector<64xf32>
    %164 = vector.shape_cast %163 : vector<64xf32> to vector<64x1xf32>
    %165 = math.log %164 : vector<64x1xf32>
    %166 = arith.addf %159, %165 : vector<64x1xf32>
    %167 = vector.broadcast %166 : vector<64x1xf32> to vector<64x128xf32>
    %168 = arith.subf %157, %167 : vector<64x128xf32>
    %c0_43 = arith.constant 0 : index
    %c0_44 = arith.constant 0 : index
    %169 = vector.load %arg9[%c0_43, %c0_44] : memref<64x128xf32, #tpu.memory_space<vmem>>, vector<64x128xf32>
    tpu.vector_store %arg9[%c0_43, %c0_44], %168 {strides = array<i32>} : memref<64x128xf32, #tpu.memory_space<vmem>>, vector<64x128xf32>,
    return
  }
}

</mosaic_0001>

<llo_original>
// kernel: bigru_forward.1
$region0: #{bigru_forward.1}
  #allocation0 [shape = 'u32[]', space=smem, size = 0x4, offset = 0x4, fixed_abs, tag = 'smem constant byte address 0x4 - core index']
  #allocation1 [shape = 'u32[144,128]{1,0:T(1,128)}', space=vmem, size = 0x12000, scoped, tag = 'internal scratch']
  %s0 = inlined_call_operand.vmem [shape: bf16[64,64], index: 0, kind: input, shape index: {}]
  %s1 = inlined_call_operand.vmem [shape: bf16[64,32], index: 1, kind: input, shape index: {}]
  %s2 = inlined_call_operand.vmem [shape: f32[1,32], index: 2, kind: input, shape index: {}]
  %s3 = inlined_call_operand.vmem [shape: bf16[64,16], index: 3, kind: input, shape index: {}]
  %s4 = inlined_call_operand.vmem [shape: f32[1,16], index: 4, kind: input, shape index: {}]
  %s5 = inlined_call_operand.vmem [shape: f32[16,32], index: 5, kind: input, shape index: {}]
  %s6 = inlined_call_operand.vmem [shape: f32[16,16], index: 6, kind: input, shape index: {}]
  %s7 = inlined_call_operand.vmem [shape: bf16[16,128], index: 7, kind: input, shape index: {}]
  %s8 = inlined_call_operand.vmem [shape: f32[1,128], index: 8, kind: input, shape index: {}]
  %s9 = inlined_call_operand.vmem [shape: f32[64,128], index: 9, kind: output, shape index: {}]
  %s10 = sld [smem:[#allocation0]]
  $region46: #{bigru_forward.1} parent=0
    _
  %s12 = ssub.s32 1, %s10
  %s13 = scalar_select 0, %s12, %s10
  // Predicated region
  $region2: #{bigru_forward.1} parent=0 // pred_check
    _
  $region3: #{bigru_forward.1} parent=0 // pred_check_branch
    %15 = sbr.rel (0) target = $region5
  $region4: #{bigru_forward.1} parent=0 // pred_region
    _
  $region5: #{bigru_forward.1} parent=0 // pred_fallthru
    _
  // Predicated region
  $region6: #{bigru_forward.1} parent=0 // pred_check
    _
  $region7: #{bigru_forward.1} parent=0 // pred_check_branch
    %17 = sbr.rel (0) target = $region9
  $region8: #{bigru_forward.1} parent=0 // pred_region
    _
  $region9: #{bigru_forward.1} parent=0 // pred_fallthru
    _
  // Predicated region
  $region10: #{bigru_forward.1} parent=0 // pred_check
    _
  $region11: #{bigru_forward.1} parent=0 // pred_check_branch
    %19 = sbr.rel (0) target = $region13
  $region12: #{bigru_forward.1} parent=0 // pred_region
    _
  $region13: #{bigru_forward.1} parent=0 // pred_fallthru
    _
  // Predicated region
  $region14: #{bigru_forward.1} parent=0 // pred_check
    _
  $region15: #{bigru_forward.1} parent=0 // pred_check_branch
    %21 = sbr.rel (0) target = $region17
  $region16: #{bigru_forward.1} parent=0 // pred_region
    _
  $region17: #{bigru_forward.1} parent=0 // pred_fallthru
    _
  // Predicated region
  $region18: #{bigru_forward.1} parent=0 // pred_check
    _
  $region19: #{bigru_forward.1} parent=0 // pred_check_branch
    %23 = sbr.rel (0) target = $region21
  $region20: #{bigru_forward.1} parent=0 // pred_region
    _
  $region21: #{bigru_forward.1} parent=0 // pred_fallthru
    _
  // Predicated region
  $region22: #{bigru_forward.1} parent=0 // pred_check
    _
  $region23: #{bigru_forward.1} parent=0 // pred_check_branch
    %25 = sbr.rel (0) target = $region25
  $region24: #{bigru_forward.1} parent=0 // pred_region
    _
  $region25: #{bigru_forward.1} parent=0 // pred_fallthru
    _
  // Predicated region
  $region26: #{bigru_forward.1} parent=0 // pred_check
    _
  $region27: #{bigru_forward.1} parent=0 // pred_check_branch
    %27 = sbr.rel (0) target = $region29
  $region28: #{bigru_forward.1} parent=0 // pred_region
    _
  $region29: #{bigru_forward.1} parent=0 // pred_fallthru
    _
  // Predicated region
  $region30: #{bigru_forward.1} parent=0 // pred_check
    _
  $region31: #{bigru_forward.1} parent=0 // pred_check_branch
    %29 = sbr.rel (0) target = $region33
  $region32: #{bigru_forward.1} parent=0 // pred_region
    _
  $region33: #{bigru_forward.1} parent=0 // pred_fallthru
    _
  // Predicated region
  $region34: #{bigru_forward.1} parent=0 // pred_check
    _
  $region35: #{bigru_forward.1} parent=0 // pred_check_branch
    %31 = sbr.rel (0) target = $region37
  $region36: #{bigru_forward.1} parent=0 // pred_region
    _
  $region37: #{bigru_forward.1} parent=0 // pred_fallthru
    _
  %v33 = vld [vmem:[%s0] sm:$0xf]
  %v34 = vld [vmem:[%s0 + $0x4] sm:$0xf]
  %v35 = vld [vmem:[%s0 + $0x8] sm:$0xf]
  %v36 = vld [vmem:[%s0 + $0xc] sm:$0xf]
  %v37 = vld [vmem:[%s0 + $0x10] sm:$0xf]
  %v38 = vld [vmem:[%s0 + $0x14] sm:$0xf]
  %v39 = vld [vmem:[%s0 + $0x18] sm:$0xf]
  %v40 = vld [vmem:[%s0 + $0x1c] sm:$0xf]
  %v41 = vld [vmem:[%s1] sm:$0xf]
  %v42 = vld [vmem:[%s1 + $0x4] sm:$0xf]
  %v43 = vld [vmem:[%s1 + $0x8] sm:$0xf]
  %v44 = vld [vmem:[%s1 + $0xc] sm:$0xf]
  %v45 = vld [vmem:[%s1 + $0x10] sm:$0xf]
  %v46 = vld [vmem:[%s1 + $0x14] sm:$0xf]
  %v47 = vld [vmem:[%s1 + $0x18] sm:$0xf]
  %v48 = vld [vmem:[%s1 + $0x1c] sm:$0xf]
  %v49 = vld [vmem:[%s2] sm:$0x1]
  %v51 = vlaneseq
  %v52 = vshrl.u32 %v51, 7
  %v53 = vsub.s32 0, %v52
  %v54 = vrot.slane %v49, %v53
  %v64 = vunpack.c.l.b16 %v33
  %v65 = vunpack.c.l.b16 %v34
  %v66 = vunpack.c.l.b16 %v35
  %v67 = vunpack.c.l.b16 %v36
  %v68 = vunpack.c.l.b16 %v37
  %v69 = vunpack.c.l.b16 %v38
  %v70 = vunpack.c.l.b16 %v39
  %v71 = vunpack.c.l.b16 %v40
  %v72 = vpack.c.b16 %v65, %v64
  %v73 = vpack.c.b16 %v67, %v66
  %v74 = vpack.c.b16 %v69, %v68
  %v75 = vpack.c.b16 %v71, %v70
  %v84 = vunpack.c.l.b16 %v41
  %v85 = vunpack.c.l.b16 %v42
  %v86 = vunpack.c.l.b16 %v43
  %v87 = vunpack.c.l.b16 %v44
  %v88 = vunpack.c.l.b16 %v45
  %v89 = vunpack.c.l.b16 %v46
  %v90 = vunpack.c.l.b16 %v47
  %v91 = vunpack.c.l.b16 %v48
  %v92 = vpack.c.b16 %v85, %v84
  %v93 = vpack.c.b16 %v87, %v86
  %v94 = vpack.c.b16 %v89, %v88
  %v95 = vpack.c.b16 %v91, %v90
  %vm100 = vcmask 523264
  %v102 = vsel %vm100, %v72, 0
  %v105 = vsel %vm100, %v73, 0
  %v108 = vsel %vm100, %v74, 0
  %v111 = vsel %vm100, %v75, 0
  %113 = vmatprep.subr.bf16.mxu0 0
  %114 = vmatpush1.bf16.msra.mxu0 0
  %115 = vmatprep.subr.bf16.mxu0 0
  %116 = vmatpush1.bf16.msra.mxu0 0
  %117 = vmatprep.subr.bf16.mxu0 0
  %118 = vmatpush1.bf16.msra.mxu0 0
  %119 = vmatprep.subr.bf16.mxu0 0
  %120 = vmatpush1.bf16.msra.mxu0 0
  %121 = vmatprep.subr.bf16.mxu0 0
  %122 = vmatpush1.bf16.msra.mxu0 %v95
  %123 = vmatprep.subr.bf16.mxu0 0
  %124 = vmatpush1.bf16.msra.mxu0 %v94
  %125 = vmatprep.subr.bf16.mxu0 0
  %126 = vmatpush1.bf16.msra.mxu0 %v93
  %127 = vmatprep.subr.bf16.mxu0 0
  %128 = vmatpush1.bf16.msra.mxu0 %v92
  %129 = vmatprep.subr.bf16.mxu0 0
  %130 = vmatpush2.bf16.msra.mxu0 0
  %131 = vmatprep.subr.bf16.mxu0 0
  %132 = vmatpush2.bf16.msra.mxu0 0
  %133 = vmatprep.subr.bf16.mxu0 0
  %134 = vmatpush2.bf16.msra.mxu0 0
  %135 = vmatprep.subr.bf16.mxu0 0
  %136 = vmatpush2.bf16.msra.mxu0 0
  %137 = vmatprep.subr.bf16.mxu0 0
  %138 = vmatpush2.bf16.msra.mxu0 0
  %139 = vmatprep.subr.bf16.mxu0 0
  %140 = vmatpush2.bf16.msra.mxu0 0
  %141 = vmatprep.subr.bf16.mxu0 0
  %142 = vmatpush2.bf16.msra.mxu0 0
  %143 = vmatprep.subr.bf16.mxu0 0
  %144 = vmatpush2.bf16.msra.mxu0 0
  %145 = vmatprep.mubr.bf16.mxu0 0
  %146 = vmatmul.mubr.bf16.gmra.mxu0 %v102
  %v147 = vpop.f32.mrf.mxu0
  %v148 = vadd.f32 %v54, %v147
  %v149 = vpop.f32.mrf.mxu0
  %v150 = vpop.f32.mrf.mxu0
  %v151 = vadd.f32 %v54, %v150
  %v152 = vpop.f32.mrf.mxu0
  %153 = vmatprep.mubr.bf16.mxu0 0
  %154 = vmatmul.mubr.bf16.gmra.mxu0 %v105
  %v155 = vpop.f32.mrf.mxu0
  %v156 = vadd.f32 %v54, %v155
  %v157 = vpop.f32.mrf.mxu0
  %v158 = vpop.f32.mrf.mxu0
  %v159 = vadd.f32 %v54, %v158
  %v160 = vpop.f32.mrf.mxu0
  %161 = vmatprep.mubr.bf16.mxu0 0
  %162 = vmatmul.mubr.bf16.gmra.mxu0 %v108
  %v163 = vpop.f32.mrf.mxu0
  %v164 = vadd.f32 %v54, %v163
  %v165 = vpop.f32.mrf.mxu0
  %v166 = vpop.f32.mrf.mxu0
  %v167 = vadd.f32 %v54, %v166
  %v168 = vpop.f32.mrf.mxu0
  %169 = vmatprep.mubr.bf16.mxu0 0
  %170 = vmatmul.mubr.bf16.gmra.mxu0 %v111
  %v171 = vpop.f32.mrf.mxu0
  %v172 = vadd.f32 %v54, %v171
  %v173 = vpop.f32.mrf.mxu0
  %v174 = vpop.f32.mrf.mxu0
  %v175 = vpop.f32.mrf.mxu0
  %176 = vdwg.mxu0
  %v177 = vld [vmem:[%s3] sm:$0xf]
  %v178 = vld [vmem:[%s3 + $0x4] sm:$0xf]
  %v179 = vld [vmem:[%s3 + $0x8] sm:$0xf]
  %v180 = vld [vmem:[%s3 + $0xc] sm:$0xf]
  %v181 = vld [vmem:[%s3 + $0x10] sm:$0xf]
  %v182 = vld [vmem:[%s3 + $0x14] sm:$0xf]
  %v183 = vld [vmem:[%s3 + $0x18] sm:$0xf]
  %v184 = vld [vmem:[%s3 + $0x1c] sm:$0xf]
  %v185 = vld [vmem:[%s4] sm:$0x1]
  %v187 = vlaneseq
  %v188 = vshrl.u32 %v187, 7
  %v189 = vsub.s32 0, %v188
  %v190 = vrot.slane %v185, %v189
  %v200 = vunpack.c.l.b16 %v177
  %v201 = vunpack.c.l.b16 %v178
  %v202 = vunpack.c.l.b16 %v179
  %v203 = vunpack.c.l.b16 %v180
  %v204 = vunpack.c.l.b16 %v181
  %v205 = vunpack.c.l.b16 %v182
  %v206 = vunpack.c.l.b16 %v183
  %v207 = vunpack.c.l.b16 %v184
  %v208 = vpack.c.b16 %v201, %v200
  %v209 = vpack.c.b16 %v203, %v202
  %v210 = vpack.c.b16 %v205, %v204
  %v211 = vpack.c.b16 %v207, %v206
  %216 = vmatprep.subr.bf16.mxu0 0
  %217 = vmatpush1.bf16.msra.mxu0 0
  %218 = vmatprep.subr.bf16.mxu0 0
  %219 = vmatpush1.bf16.msra.mxu0 0
  %220 = vmatprep.subr.bf16.mxu0 0
  %221 = vmatpush1.bf16.msra.mxu0 0
  %222 = vmatprep.subr.bf16.mxu0 0
  %223 = vmatpush1.bf16.msra.mxu0 0
  %224 = vmatprep.subr.bf16.mxu0 0
  %225 = vmatpush1.bf16.msra.mxu0 %v211
  %226 = vmatprep.subr.bf16.mxu0 0
  %227 = vmatpush1.bf16.msra.mxu0 %v210
  %228 = vmatprep.subr.bf16.mxu0 0
  %229 = vmatpush1.bf16.msra.mxu0 %v209
  %230 = vmatprep.subr.bf16.mxu0 0
  %231 = vmatpush1.bf16.msra.mxu0 %v208
  %232 = vmatprep.subr.bf16.mxu0 0
  %233 = vmatpush2.bf16.msra.mxu0 0
  %234 = vmatprep.subr.bf16.mxu0 0
  %235 = vmatpush2.bf16.msra.mxu0 0
  %236 = vmatprep.subr.bf16.mxu0 0
  %237 = vmatpush2.bf16.msra.mxu0 0
  %238 = vmatprep.subr.bf16.mxu0 0
  %239 = vmatpush2.bf16.msra.mxu0 0
  %240 = vmatprep.subr.bf16.mxu0 0
  %241 = vmatpush2.bf16.msra.mxu0 0
  %242 = vmatprep.subr.bf16.mxu0 0
  %243 = vmatpush2.bf16.msra.mxu0 0
  %244 = vmatprep.subr.bf16.mxu0 0
  %245 = vmatpush2.bf16.msra.mxu0 0
  %246 = vmatprep.subr.bf16.mxu0 0
  %247 = vmatpush2.bf16.msra.mxu0 0
  %248 = vmatprep.mubr.bf16.mxu0 0
  %249 = vmatmul.mubr.bf16.gmra.mxu0 %v102
  %v250 = vpop.f32.mrf.mxu0
  %v251 = vadd.f32 %v190, %v250
  %v252 = vpop.f32.mrf.mxu0
  %v253 = vpop.f32.mrf.mxu0
  %v254 = vadd.f32 %v190, %v253
  %v255 = vpop.f32.mrf.mxu0
  %256 = vmatprep.mubr.bf16.mxu0 0
  %257 = vmatmul.mubr.bf16.gmra.mxu0 %v105
  %v258 = vpop.f32.mrf.mxu0
  %v259 = vadd.f32 %v190, %v258
  %v260 = vpop.f32.mrf.mxu0
  %v261 = vpop.f32.mrf.mxu0
  %v262 = vadd.f32 %v190, %v261
  %v263 = vpop.f32.mrf.mxu0
  %264 = vmatprep.mubr.bf16.mxu0 0
  %265 = vmatmul.mubr.bf16.gmra.mxu0 %v108
  %v266 = vpop.f32.mrf.mxu0
  %v267 = vadd.f32 %v190, %v266
  %v268 = vpop.f32.mrf.mxu0
  %v269 = vpop.f32.mrf.mxu0
  %v270 = vadd.f32 %v190, %v269
  %v271 = vpop.f32.mrf.mxu0
  %272 = vmatprep.mubr.bf16.mxu0 0
  %273 = vmatmul.mubr.bf16.gmra.mxu0 %v111
  %v274 = vpop.f32.mrf.mxu0
  %v275 = vadd.f32 %v190, %v274
  %v276 = vpop.f32.mrf.mxu0
  %v277 = vpop.f32.mrf.mxu0
  %v278 = vpop.f32.mrf.mxu0
  %279 = vdwg.mxu0
  %v280 = vld [vmem:[%s5] sm:$0xff]
  %v281 = vld [vmem:[%s5 + $0x8] sm:$0xff]
  %v282 = vld [vmem:[%s6] sm:$0xff]
  %v283 = vld [vmem:[%s6 + $0x8] sm:$0xff]
  %vm284 = vcmask 130048
  %v286 = vsel %vm284, 0.0, 0
  %288 = vmatprep.subr.mxu0 0.0
  %289 = vmatpush1.msra.mxu0 0.0
  %290 = vmatprep.subr.mxu0 0.0
  %291 = vmatpush1.msra.mxu0 0.0
  %292 = vmatprep.subr.mxu0 0.0
  %293 = vmatpush1.msra.mxu0 0.0
  %294 = vmatprep.subr.mxu0 0.0
  %295 = vmatpush1.msra.mxu0 0.0
  %296 = vmatprep.subr.mxu0 0.0
  %297 = vmatpush1.msra.mxu0 0.0
  %298 = vmatprep.subr.mxu0 0.0
  %299 = vmatpush1.msra.mxu0 0.0
  %300 = vmatprep.subr.mxu0 0.0
  %301 = vmatpush1.msra.mxu0 0.0
  %302 = vmatprep.subr.mxu0 0.0
  %303 = vmatpush1.msra.mxu0 0.0
  %304 = vmatprep.subr.mxu0 0.0
  %305 = vmatpush1.msra.mxu0 0.0
  %306 = vmatprep.subr.mxu0 0.0
  %307 = vmatpush1.msra.mxu0 0.0
  %308 = vmatprep.subr.mxu0 0.0
  %309 = vmatpush1.msra.mxu0 0.0
  %310 = vmatprep.subr.mxu0 0.0
  %311 = vmatpush1.msra.mxu0 0.0
  %312 = vmatprep.subr.mxu0 0.0
  %313 = vmatpush1.msra.mxu0 0.0
  %314 = vmatprep.subr.mxu0 0.0
  %315 = vmatpush1.msra.mxu0 0.0
  %316 = vmatprep.subr.mxu0 0.0
  %317 = vmatpush1.msra.mxu0 %v281
  %318 = vmatprep.subr.mxu0 0.0
  %319 = vmatpush1.msra.mxu0 %v280
  %320 = vmatprep.subr.mxu0 0.0
  %321 = vmatpush2.msra.mxu0 0.0
  %322 = vmatprep.subr.mxu0 0.0
  %323 = vmatpush2.msra.mxu0 0.0
  %324 = vmatprep.subr.mxu0 0.0
  %325 = vmatpush2.msra.mxu0 0.0
  %326 = vmatprep.subr.mxu0 0.0
  %327 = vmatpush2.msra.mxu0 0.0
  %328 = vmatprep.subr.mxu0 0.0
  %329 = vmatpush2.msra.mxu0 0.0
  %330 = vmatprep.subr.mxu0 0.0
  %331 = vmatpush2.msra.mxu0 0.0
  %332 = vmatprep.subr.mxu0 0.0
  %333 = vmatpush2.msra.mxu0 0.0
  %334 = vmatprep.subr.mxu0 0.0
  %335 = vmatpush2.msra.mxu0 0.0
  %336 = vmatprep.subr.mxu0 0.0
  %337 = vmatpush2.msra.mxu0 0.0
  %338 = vmatprep.subr.mxu0 0.0
  %339 = vmatpush2.msra.mxu0 0.0
  %340 = vmatprep.subr.mxu0 0.0
  %341 = vmatpush2.msra.mxu0 0.0
  %342 = vmatprep.subr.mxu0 0.0
  %343 = vmatpush2.msra.mxu0 0.0
  %344 = vmatprep.subr.mxu0 0.0
  %345 = vmatpush2.msra.mxu0 0.0
  %346 = vmatprep.subr.mxu0 0.0
  %347 = vmatpush2.msra.mxu0 0.0
  %348 = vmatprep.subr.mxu0 0.0
  %349 = vmatpush2.msra.mxu0 0.0
  %350 = vmatprep.subr.mxu0 0.0
  %351 = vmatpush2.msra.mxu0 0.0
  %352 = vmatprep.mubr.f32.mxu0 0.0
  %353 = vmatmul.mubr.f32.gmra.mxu0 %v286
  %v354 = vpop.f32.mrf.mxu0
  %v355 = vadd.f32 %v148, %v354
  %v356 = vpop.f32.mrf.mxu0
  %357 = vdwg.mxu0
  %v358 = vxor.u32 %v355, 2147483648
  %v359 = vmul.f32 %v358, 1.442695
  %v360 = vpow.pop %v359
  %v361 = vadd.f32 %v360, 1.0
  %v362 = vrcp.pop %v361
  %v363 = vmul.f32 1.0, %v362
  %v364 = vmul.f32 %v363, 0.0
  %366 = vrot.lane.b32.xlu0 %v364, 112
  %v367 = vpop.permute.xlu0 %366
  %v368 = vsel %vm284, %v367, 0
  %370 = vmatprep.subr.mxu0 0.0
  %371 = vmatpush1.msra.mxu0 0.0
  %372 = vmatprep.subr.mxu0 0.0
  %373 = vmatpush1.msra.mxu0 0.0
  %374 = vmatprep.subr.mxu0 0.0
  %375 = vmatpush1.msra.mxu0 0.0
  %376 = vmatprep.subr.mxu0 0.0
  %377 = vmatpush1.msra.mxu0 0.0
  %378 = vmatprep.subr.mxu0 0.0
  %379 = vmatpush1.msra.mxu0 0.0
  %380 = vmatprep.subr.mxu0 0.0
  %381 = vmatpush1.msra.mxu0 0.0
  %382 = vmatprep.subr.mxu0 0.0
  %383 = vmatpush1.msra.mxu0 0.0
  %384 = vmatprep.subr.mxu0 0.0
  %385 = vmatpush1.msra.mxu0 0.0
  %386 = vmatprep.subr.mxu0 0.0
  %387 = vmatpush1.msra.mxu0 0.0
  %388 = vmatprep.subr.mxu0 0.0
  %389 = vmatpush1.msra.mxu0 0.0
  %390 = vmatprep.subr.mxu0 0.0
  %391 = vmatpush1.msra.mxu0 0.0
  %392 = vmatprep.subr.mxu0 0.0
  %393 = vmatpush1.msra.mxu0 0.0
  %394 = vmatprep.subr.mxu0 0.0
  %395 = vmatpush1.msra.mxu0 0.0
  %396 = vmatprep.subr.mxu0 0.0
  %397 = vmatpush1.msra.mxu0 0.0
  %398 = vmatprep.subr.mxu0 0.0
  %399 = vmatpush1.msra.mxu0 %v283
  %400 = vmatprep.subr.mxu0 0.0
  %401 = vmatpush1.msra.mxu0 %v282
  %402 = vmatprep.subr.mxu0 0.0
  %403 = vmatpush2.msra.mxu0 0.0
  %404 = vmatprep.subr.mxu0 0.0
  %405 = vmatpush2.msra.mxu0 0.0
  %406 = vmatprep.subr.mxu0 0.0
  %407 = vmatpush2.msra.mxu0 0.0
  %408 = vmatprep.subr.mxu0 0.0
  %409 = vmatpush2.msra.mxu0 0.0
  %410 = vmatprep.subr.mxu0 0.0
  %411 = vmatpush2.msra.mxu0 0.0
  %412 = vmatprep.subr.mxu0 0.0
  %413 = vmatpush2.msra.mxu0 0.0
  %414 = vmatprep.subr.mxu0 0.0
  %415 = vmatpush2.msra.mxu0 0.0
  %416 = vmatprep.subr.mxu0 0.0
  %417 = vmatpush2.msra.mxu0 0.0
  %418 = vmatprep.subr.mxu0 0.0
  %419 = vmatpush2.msra.mxu0 0.0
  %420 = vmatprep.subr.mxu0 0.0
  %421 = vmatpush2.msra.mxu0 0.0
  %422 = vmatprep.subr.mxu0 0.0
  %423 = vmatpush2.msra.mxu0 0.0
  %424 = vmatprep.subr.mxu0 0.0
  %425 = vmatpush2.msra.mxu0 0.0
  %426 = vmatprep.subr.mxu0 0.0
  %427 = vmatpush2.msra.mxu0 0.0
  %428 = vmatprep.subr.mxu0 0.0
  %429 = vmatpush2.msra.mxu0 0.0
  %430 = vmatprep.subr.mxu0 0.0
  %431 = vmatpush2.msra.mxu0 0.0
  %432 = vmatprep.subr.mxu0 0.0
  %433 = vmatpush2.msra.mxu0 0.0
  %434 = vmatprep.mubr.f32.mxu0 0.0
  %435 = vmatmul.mubr.f32.gmra.mxu0 %v368
  %v436 = vpop.f32.mrf.mxu0
  %v437 = vadd.f32 %v251, %v436
  %v438 = vpop.f32.mrf.mxu0
  %439 = vdwg.mxu0
  %v440 = vtanh.pop %v437
  %v441 = vmul.f32 %v363, %v440
  %v442 = vadd.f32 %v441, 0.0
  %v444 = vsel %vm284, %v442, 0
  %446 = vmatprep.subr.mxu0 0.0
  %447 = vmatpush1.msra.mxu0 0.0
  %448 = vmatprep.subr.mxu0 0.0
  %449 = vmatpush1.msra.mxu0 0.0
  %450 = vmatprep.subr.mxu0 0.0
  %451 = vmatpush1.msra.mxu0 0.0
  %452 = vmatprep.subr.mxu0 0.0
  %453 = vmatpush1.msra.mxu0 0.0
  %454 = vmatprep.subr.mxu0 0.0
  %455 = vmatpush1.msra.mxu0 0.0
  %456 = vmatprep.subr.mxu0 0.0
  %457 = vmatpush1.msra.mxu0 0.0
  %458 = vmatprep.subr.mxu0 0.0
  %459 = vmatpush1.msra.mxu0 0.0
  %460 = vmatprep.subr.mxu0 0.0
  %461 = vmatpush1.msra.mxu0 0.0
  %462 = vmatprep.subr.mxu0 0.0
  %463 = vmatpush1.msra.mxu0 0.0
  %464 = vmatprep.subr.mxu0 0.0
  %465 = vmatpush1.msra.mxu0 0.0
  %466 = vmatprep.subr.mxu0 0.0
  %467 = vmatpush1.msra.mxu0 0.0
  %468 = vmatprep.subr.mxu0 0.0
  %469 = vmatpush1.msra.mxu0 0.0
  %470 = vmatprep.subr.mxu0 0.0
  %471 = vmatpush1.msra.mxu0 0.0
  %472 = vmatprep.subr.mxu0 0.0
  %473 = vmatpush1.msra.mxu0 0.0
  %474 = vmatprep.subr.mxu0 0.0
  %475 = vmatpush1.msra.mxu0 %v281
  %476 = vmatprep.subr.mxu0 0.0
  %477 = vmatpush1.msra.mxu0 %v280
  %478 = vmatprep.subr.mxu0 0.0
  %479 = vmatpush2.msra.mxu0 0.0
  %480 = vmatprep.subr.mxu0 0.0
  %481 = vmatpush2.msra.mxu0 0.0
  %482 = vmatprep.subr.mxu0 0.0
  %483 = vmatpush2.msra.mxu0 0.0
  %484 = vmatprep.subr.mxu0 0.0
  %485 = vmatpush2.msra.mxu0 0.0
  %486 = vmatprep.subr.mxu0 0.0
  %487 = vmatpush2.msra.mxu0 0.0
  %488 = vmatprep.subr.mxu0 0.0
  %489 = vmatpush2.msra.mxu0 0.0
  %490 = vmatprep.subr.mxu0 0.0
  %491 = vmatpush2.msra.mxu0 0.0
  %492 = vmatprep.subr.mxu0 0.0
  %493 = vmatpush2.msra.mxu0 0.0
  %494 = vmatprep.subr.mxu0 0.0
  %495 = vmatpush2.msra.mxu0 0.0
  %496 = vmatprep.subr.mxu0 0.0
  %497 = vmatpush2.msra.mxu0 0.0
  %498 = vmatprep.subr.mxu0 0.0
  %499 = vmatpush2.msra.mxu0 0.0
  %500 = vmatprep.subr.mxu0 0.0
  %501 = vmatpush2.msra.mxu0 0.0
  %502 = vmatprep.subr.mxu0 0.0
  %503 = vmatpush2.msra.mxu0 0.0
  %504 = vmatprep.subr.mxu0 0.0
  %505 = vmatpush2.msra.mxu0 0.0
  %506 = vmatprep.subr.mxu0 0.0
  %507 = vmatpush2.msra.mxu0 0.0
  %508 = vmatprep.subr.mxu0 0.0
  %509 = vmatpush2.msra.mxu0 0.0
  %510 = vmatprep.mubr.f32.mxu0 0.0
  %511 = vmatmul.mubr.f32.gmra.mxu0 %v444
  %v512 = vpop.f32.mrf.mxu0
  %v513 = vadd.f32 %v151, %v512
  %v514 = vpop.f32.mrf.mxu0
  %515 = vdwg.mxu0
  %v516 = vxor.u32 %v513, 2147483648
  %v517 = vmul.f32 %v516, 1.442695
  %v518 = vpow.pop %v517
  %v519 = vadd.f32 %v518, 1.0
  %v520 = vrcp.pop %v519
  %v521 = vmul.f32 1.0, %v520
  %522 = vrot.lane.b32.xlu0 %v442, 16
  %v523 = vpop.permute.xlu0 %522
  %v525 = vmul.f32 %v521, %v523
  %527 = vrot.lane.b32.xlu0 %v525, 112
  %v528 = vpop.permute.xlu0 %527
  %v529 = vsel %vm284, %v528, 0
  %531 = vmatprep.subr.mxu0 0.0
  %532 = vmatpush1.msra.mxu0 0.0
  %533 = vmatprep.subr.mxu0 0.0
  %534 = vmatpush1.msra.mxu0 0.0
  %535 = vmatprep.subr.mxu0 0.0
  %536 = vmatpush1.msra.mxu0 0.0
  %537 = vmatprep.subr.mxu0 0.0
  %538 = vmatpush1.msra.mxu0 0.0
  %539 = vmatprep.subr.mxu0 0.0
  %540 = vmatpush1.msra.mxu0 0.0
  %541 = vmatprep.subr.mxu0 0.0
  %542 = vmatpush1.msra.mxu0 0.0
  %543 = vmatprep.subr.mxu0 0.0
  %544 = vmatpush1.msra.mxu0 0.0
  %545 = vmatprep.subr.mxu0 0.0
  %546 = vmatpush1.msra.mxu0 0.0
  %547 = vmatprep.subr.mxu0 0.0
  %548 = vmatpush1.msra.mxu0 0.0
  %549 = vmatprep.subr.mxu0 0.0
  %550 = vmatpush1.msra.mxu0 0.0
  %551 = vmatprep.subr.mxu0 0.0
  %552 = vmatpush1.msra.mxu0 0.0
  %553 = vmatprep.subr.mxu0 0.0
  %554 = vmatpush1.msra.mxu0 0.0
  %555 = vmatprep.subr.mxu0 0.0
  %556 = vmatpush1.msra.mxu0 0.0
  %557 = vmatprep.subr.mxu0 0.0
  %558 = vmatpush1.msra.mxu0 0.0
  %559 = vmatprep.subr.mxu0 0.0
  %560 = vmatpush1.msra.mxu0 %v283
  %561 = vmatprep.subr.mxu0 0.0
  %562 = vmatpush1.msra.mxu0 %v282
  %563 = vmatprep.subr.mxu0 0.0
  %564 = vmatpush2.msra.mxu0 0.0
  %565 = vmatprep.subr.mxu0 0.0
  %566 = vmatpush2.msra.mxu0 0.0
  %567 = vmatprep.subr.mxu0 0.0
  %568 = vmatpush2.msra.mxu0 0.0
  %569 = vmatprep.subr.mxu0 0.0
  %570 = vmatpush2.msra.mxu0 0.0
  %571 = vmatprep.subr.mxu0 0.0
  %572 = vmatpush2.msra.mxu0 0.0
  %573 = vmatprep.subr.mxu0 0.0
  %574 = vmatpush2.msra.mxu0 0.0
  %575 = vmatprep.subr.mxu0 0.0
  %576 = vmatpush2.msra.mxu0 0.0
  %577 = vmatprep.subr.mxu0 0.0
  %578 = vmatpush2.msra.mxu0 0.0
  %579 = vmatprep.subr.mxu0 0.0
  %580 = vmatpush2.msra.mxu0 0.0
  %581 = vmatprep.subr.mxu0 0.0
  %582 = vmatpush2.msra.mxu0 0.0
  %583 = vmatprep.subr.mxu0 0.0
  %584 = vmatpush2.msra.mxu0 0.0
  %585 = vmatprep.subr.mxu0 0.0
  %586 = vmatpush2.msra.mxu0 0.0
  %587 = vmatprep.subr.mxu0 0.0
  %588 = vmatpush2.msra.mxu0 0.0
  %589 = vmatprep.subr.mxu0 0.0
  %590 = vmatpush2.msra.mxu0 0.0
  %591 = vmatprep.subr.mxu0 0.0
  %592 = vmatpush2.msra.mxu0 0.0
  %593 = vmatprep.subr.mxu0 0.0
  %594 = vmatpush2.msra.mxu0 0.0
  %595 = vmatprep.mubr.f32.mxu0 0.0
  %596 = vmatmul.mubr.f32.gmra.mxu0 %v529
  %v597 = vpop.f32.mrf.mxu0
  %v598 = vadd.f32 %v254, %v597
  %v599 = vpop.f32.mrf.mxu0
  %600 = vdwg.mxu0
  %v601 = vtanh.pop %v598
  %v602 = vsub.f32 %v601, %v442
  %v603 = vmul.f32 %v521, %v602
  %v604 = vadd.f32 %v442, %v603
  %v606 = vsel %vm284, %v604, 0
  %608 = vmatprep.subr.mxu0 0.0
  %609 = vmatpush1.msra.mxu0 0.0
  %610 = vmatprep.subr.mxu0 0.0
  %611 = vmatpush1.msra.mxu0 0.0
  %612 = vmatprep.subr.mxu0 0.0
  %613 = vmatpush1.msra.mxu0 0.0
  %614 = vmatprep.subr.mxu0 0.0
  %615 = vmatpush1.msra.mxu0 0.0
  %616 = vmatprep.subr.mxu0 0.0
  %617 = vmatpush1.msra.mxu0 0.0
  %618 = vmatprep.subr.mxu0 0.0
  %619 = vmatpush1.msra.mxu0 0.0
  %620 = vmatprep.subr.mxu0 0.0
  %621 = vmatpush1.msra.mxu0 0.0
  %622 = vmatprep.subr.mxu0 0.0
  %623 = vmatpush1.msra.mxu0 0.0
  %624 = vmatprep.subr.mxu0 0.0
  %625 = vmatpush1.msra.mxu0 0.0
  %626 = vmatprep.subr.mxu0 0.0
  %627 = vmatpush1.msra.mxu0 0.0
  %628 = vmatprep.subr.mxu0 0.0
  %629 = vmatpush1.msra.mxu0 0.0
  %630 = vmatprep.subr.mxu0 0.0
  %631 = vmatpush1.msra.mxu0 0.0
  %632 = vmatprep.subr.mxu0 0.0
  %633 = vmatpush1.msra.mxu0 0.0
  %634 = vmatprep.subr.mxu0 0.0
  %635 = vmatpush1.msra.mxu0 0.0
  %636 = vmatprep.subr.mxu0 0.0
  %637 = vmatpush1.msra.mxu0 %v281
  %638 = vmatprep.subr.mxu0 0.0
  %639 = vmatpush1.msra.mxu0 %v280
  %640 = vmatprep.subr.mxu0 0.0
  %641 = vmatpush2.msra.mxu0 0.0
  %642 = vmatprep.subr.mxu0 0.0
  %643 = vmatpush2.msra.mxu0 0.0
  %644 = vmatprep.subr.mxu0 0.0
  %645 = vmatpush2.msra.mxu0 0.0
  %646 = vmatprep.subr.mxu0 0.0
  %647 = vmatpush2.msra.mxu0 0.0
  %648 = vmatprep.subr.mxu0 0.0
  %649 = vmatpush2.msra.mxu0 0.0
  %650 = vmatprep.subr.mxu0 0.0
  %651 = vmatpush2.msra.mxu0 0.0
  %652 = vmatprep.subr.mxu0 0.0
  %653 = vmatpush2.msra.mxu0 0.0
  %654 = vmatprep.subr.mxu0 0.0
  %655 = vmatpush2.msra.mxu0 0.0
  %656 = vmatprep.subr.mxu0 0.0
  %657 = vmatpush2.msra.mxu0 0.0
  %658 = vmatprep.subr.mxu0 0.0
  %659 = vmatpush2.msra.mxu0 0.0
  %660 = vmatprep.subr.mxu0 0.0
  %661 = vmatpush2.msra.mxu0 0.0
  %662 = vmatprep.subr.mxu0 0.0
  %663 = vmatpush2.msra.mxu0 0.0
  %664 = vmatprep.subr.mxu0 0.0
  %665 = vmatpush2.msra.mxu0 0.0
  %666 = vmatprep.subr.mxu0 0.0
  %667 = vmatpush2.msra.mxu0 0.0
  %668 = vmatprep.subr.mxu0 0.0
  %669 = vmatpush2.msra.mxu0 0.0
  %670 = vmatprep.subr.mxu0 0.0
  %671 = vmatpush2.msra.mxu0 0.0
  %672 = vmatprep.mubr.f32.mxu0 0.0
  %673 = vmatmul.mubr.f32.gmra.mxu0 %v606
  %v674 = vpop.f32.mrf.mxu0
  %v675 = vadd.f32 %v156, %v674
  %v676 = vpop.f32.mrf.mxu0
  %677 = vdwg.mxu0
  %v678 = vxor.u32 %v675, 2147483648
  %v679 = vmul.f32 %v678, 1.442695
  %v680 = vpow.pop %v679
  %v681 = vadd.f32 %v680, 1.0
  %v682 = vrcp.pop %v681
  %v683 = vmul.f32 1.0, %v682
  %684 = vrot.lane.b32.xlu0 %v604, 16
  %v685 = vpop.permute.xlu0 %684
  %v687 = vmul.f32 %v683, %v685
  %689 = vrot.lane.b32.xlu0 %v687, 112
  %v690 = vpop.permute.xlu0 %689
  %v691 = vsel %vm284, %v690, 0
  %693 = vmatprep.subr.mxu0 0.0
  %694 = vmatpush1.msra.mxu0 0.0
  %695 = vmatprep.subr.mxu0 0.0
  %696 = vmatpush1.msra.mxu0 0.0
  %697 = vmatprep.subr.mxu0 0.0
  %698 = vmatpush1.msra.mxu0 0.0
  %699 = vmatprep.subr.mxu0 0.0
  %700 = vmatpush1.msra.mxu0 0.0
  %701 = vmatprep.subr.mxu0 0.0
  %702 = vmatpush1.msra.mxu0 0.0
  %703 = vmatprep.subr.mxu0 0.0
  %704 = vmatpush1.msra.mxu0 0.0
  %705 = vmatprep.subr.mxu0 0.0
  %706 = vmatpush1.msra.mxu0 0.0
  %707 = vmatprep.subr.mxu0 0.0
  %708 = vmatpush1.msra.mxu0 0.0
  %709 = vmatprep.subr.mxu0 0.0
  %710 = vmatpush1.msra.mxu0 0.0
  %711 = vmatprep.subr.mxu0 0.0
  %712 = vmatpush1.msra.mxu0 0.0
  %713 = vmatprep.subr.mxu0 0.0
  %714 = vmatpush1.msra.mxu0 0.0
  %715 = vmatprep.subr.mxu0 0.0
  %716 = vmatpush1.msra.mxu0 0.0
  %717 = vmatprep.subr.mxu0 0.0
  %718 = vmatpush1.msra.mxu0 0.0
  %719 = vmatprep.subr.mxu0 0.0
  %720 = vmatpush1.msra.mxu0 0.0
  %721 = vmatprep.subr.mxu0 0.0
  %722 = vmatpush1.msra.mxu0 %v283
  %723 = vmatprep.subr.mxu0 0.0
  %724 = vmatpush1.msra.mxu0 %v282
  %725 = vmatprep.subr.mxu0 0.0
  %726 = vmatpush2.msra.mxu0 0.0
  %727 = vmatprep.subr.mxu0 0.0
  %728 = vmatpush2.msra.mxu0 0.0
  %729 = vmatprep.subr.mxu0 0.0
  %730 = vmatpush2.msra.mxu0 0.0
  %731 = vmatprep.subr.mxu0 0.0
  %732 = vmatpush2.msra.mxu0 0.0
  %733 = vmatprep.subr.mxu0 0.0
  %734 = vmatpush2.msra.mxu0 0.0
  %735 = vmatprep.subr.mxu0 0.0
  %736 = vmatpush2.msra.mxu0 0.0
  %737 = vmatprep.subr.mxu0 0.0
  %738 = vmatpush2.msra.mxu0 0.0
  %739 = vmatprep.subr.mxu0 0.0
  %740 = vmatpush2.msra.mxu0 0.0
  %741 = vmatprep.subr.mxu0 0.0
  %742 = vmatpush2.msra.mxu0 0.0
  %743 = vmatprep.subr.mxu0 0.0
  %744 = vmatpush2.msra.mxu0 0.0
  %745 = vmatprep.subr.mxu0 0.0
  %746 = vmatpush2.msra.mxu0 0.0
  %747 = vmatprep.subr.mxu0 0.0
  %748 = vmatpush2.msra.mxu0 0.0
  %749 = vmatprep.subr.mxu0 0.0
  %750 = vmatpush2.msra.mxu0 0.0
  %751 = vmatprep.subr.mxu0 0.0
  %752 = vmatpush2.msra.mxu0 0.0
  %753 = vmatprep.subr.mxu0 0.0
  %754 = vmatpush2.msra.mxu0 0.0
  %755 = vmatprep.subr.mxu0 0.0
  %756 = vmatpush2.msra.mxu0 0.0
  %757 = vmatprep.mubr.f32.mxu0 0.0
  %758 = vmatmul.mubr.f32.gmra.mxu0 %v691
  %v759 = vpop.f32.mrf.mxu0
  %v760 = vadd.f32 %v259, %v759
  %v761 = vpop.f32.mrf.mxu0
  %762 = vdwg.mxu0
  %v763 = vtanh.pop %v760
  %v764 = vsub.f32 %v763, %v604
  %v765 = vmul.f32 %v683, %v764
  %v766 = vadd.f32 %v604, %v765
  %v768 = vsel %vm284, %v766, 0
  %770 = vmatprep.subr.mxu0 0.0
  %771 = vmatpush1.msra.mxu0 0.0
  %772 = vmatprep.subr.mxu0 0.0
  %773 = vmatpush1.msra.mxu0 0.0
  %774 = vmatprep.subr.mxu0 0.0
  %775 = vmatpush1.msra.mxu0 0.0
  %776 = vmatprep.subr.mxu0 0.0
  %777 = vmatpush1.msra.mxu0 0.0
  %778 = vmatprep.subr.mxu0 0.0
  %779 = vmatpush1.msra.mxu0 0.0
  %780 = vmatprep.subr.mxu0 0.0
  %781 = vmatpush1.msra.mxu0 0.0
  %782 = vmatprep.subr.mxu0 0.0
  %783 = vmatpush1.msra.mxu0 0.0
  %784 = vmatprep.subr.mxu0 0.0
  %785 = vmatpush1.msra.mxu0 0.0
  %786 = vmatprep.subr.mxu0 0.0
  %787 = vmatpush1.msra.mxu0 0.0
  %788 = vmatprep.subr.mxu0 0.0
  %789 = vmatpush1.msra.mxu0 0.0
  %790 = vmatprep.subr.mxu0 0.0
  %791 = vmatpush1.msra.mxu0 0.0
  %792 = vmatprep.subr.mxu0 0.0
  %793 = vmatpush1.msra.mxu0 0.0
  %794 = vmatprep.subr.mxu0 0.0
  %795 = vmatpush1.msra.mxu0 0.0
  %796 = vmatprep.subr.mxu0 0.0
  %797 = vmatpush1.msra.mxu0 0.0
  %798 = vmatprep.subr.mxu0 0.0
  %799 = vmatpush1.msra.mxu0 %v281
  %800 = vmatprep.subr.mxu0 0.0
  %801 = vmatpush1.msra.mxu0 %v280
  %802 = vmatprep.subr.mxu0 0.0
  %803 = vmatpush2.msra.mxu0 0.0
  %804 = vmatprep.subr.mxu0 0.0
  %805 = vmatpush2.msra.mxu0 0.0
  %806 = vmatprep.subr.mxu0 0.0
  %807 = vmatpush2.msra.mxu0 0.0
  %808 = vmatprep.subr.mxu0 0.0
  %809 = vmatpush2.msra.mxu0 0.0
  %810 = vmatprep.subr.mxu0 0.0
  %811 = vmatpush2.msra.mxu0 0.0
  %812 = vmatprep.subr.mxu0 0.0
  %813 = vmatpush2.msra.mxu0 0.0
  %814 = vmatprep.subr.mxu0 0.0
  %815 = vmatpush2.msra.mxu0 0.0
  %816 = vmatprep.subr.mxu0 0.0
  %817 = vmatpush2.msra.mxu0 0.0
  %818 = vmatprep.subr.mxu0 0.0
  %819 = vmatpush2.msra.mxu0 0.0
  %820 = vmatprep.subr.mxu0 0.0
  %821 = vmatpush2.msra.mxu0 0.0
  %822 = vmatprep.subr.mxu0 0.0
  %823 = vmatpush2.msra.mxu0 0.0
  %824 = vmatprep.subr.mxu0 0.0
  %825 = vmatpush2.msra.mxu0 0.0
  %826 = vmatprep.subr.mxu0 0.0
  %827 = vmatpush2.msra.mxu0 0.0
  %828 = vmatprep.subr.mxu0 0.0
  %829 = vmatpush2.msra.mxu0 0.0
  %830 = vmatprep.subr.mxu0 0.0
  %831 = vmatpush2.msra.mxu0 0.0
  %832 = vmatprep.subr.mxu0 0.0
  %833 = vmatpush2.msra.mxu0 0.0
  %834 = vmatprep.mubr.f32.mxu0 0.0
  %835 = vmatmul.mubr.f32.gmra.mxu0 %v768
  %v836 = vpop.f32.mrf.mxu0
  %v837 = vadd.f32 %v159, %v836
  %v838 = vpop.f32.mrf.mxu0
  %839 = vdwg.mxu0
  %v840 = vxor.u32 %v837, 2147483648
  %v841 = vmul.f32 %v840, 1.442695
  %v842 = vpow.pop %v841
  %v843 = vadd.f32 %v842, 1.0
  %v844 = vrcp.pop %v843
  %v845 = vmul.f32 1.0, %v844
  %846 = vrot.lane.b32.xlu0 %v766, 16
  %v847 = vpop.permute.xlu0 %846
  %v849 = vmul.f32 %v845, %v847
  %851 = vrot.lane.b32.xlu0 %v849, 112
  %v852 = vpop.permute.xlu0 %851
  %v853 = vsel %vm284, %v852, 0
  %855 = vmatprep.subr.mxu0 0.0
  %856 = vmatpush1.msra.mxu0 0.0
  %857 = vmatprep.subr.mxu0 0.0
  %858 = vmatpush1.msra.mxu0 0.0
  %859 = vmatprep.subr.mxu0 0.0
  %860 = vmatpush1.msra.mxu0 0.0
  %861 = vmatprep.subr.mxu0 0.0
  %862 = vmatpush1.msra.mxu0 0.0
  %863 = vmatprep.subr.mxu0 0.0
  %864 = vmatpush1.msra.mxu0 0.0
  %865 = vmatprep.subr.mxu0 0.0
  %866 = vmatpush1.msra.mxu0 0.0
  %867 = vmatprep.subr.mxu0 0.0
  %868 = vmatpush1.msra.mxu0 0.0
  %869 = vmatprep.subr.mxu0 0.0
  %870 = vmatpush1.msra.mxu0 0.0
  %871 = vmatprep.subr.mxu0 0.0
  %872 = vmatpush1.msra.mxu0 0.0
  %873 = vmatprep.subr.mxu0 0.0
  %874 = vmatpush1.msra.mxu0 0.0
  %875 = vmatprep.subr.mxu0 0.0
  %876 = vmatpush1.msra.mxu0 0.0
  %877 = vmatprep.subr.mxu0 0.0
  %878 = vmatpush1.msra.mxu0 0.0
  %879 = vmatprep.subr.mxu0 0.0
  %880 = vmatpush1.msra.mxu0 0.0
  %881 = vmatprep.subr.mxu0 0.0
  %882 = vmatpush1.msra.mxu0 0.0
  %883 = vmatprep.subr.mxu0 0.0
  %884 = vmatpush1.msra.mxu0 %v283
  %885 = vmatprep.subr.mxu0 0.0
  %886 = vmatpush1.msra.mxu0 %v282
  %887 = vmatprep.subr.mxu0 0.0
  %888 = vmatpush2.msra.mxu0 0.0
  %889 = vmatprep.subr.mxu0 0.0
  %890 = vmatpush2.msra.mxu0 0.0
  %891 = vmatprep.subr.mxu0 0.0
  %892 = vmatpush2.msra.mxu0 0.0
  %893 = vmatprep.subr.mxu0 0.0
  %894 = vmatpush2.msra.mxu0 0.0
  %895 = vmatprep.subr.mxu0 0.0
  %896 = vmatpush2.msra.mxu0 0.0
  %897 = vmatprep.subr.mxu0 0.0
  %898 = vmatpush2.msra.mxu0 0.0
  %899 = vmatprep.subr.mxu0 0.0
  %900 = vmatpush2.msra.mxu0 0.0
  %901 = vmatprep.subr.mxu0 0.0
  %902 = vmatpush2.msra.mxu0 0.0
  %903 = vmatprep.subr.mxu0 0.0
  %904 = vmatpush2.msra.mxu0 0.0
  %905 = vmatprep.subr.mxu0 0.0
  %906 = vmatpush2.msra.mxu0 0.0
  %907 = vmatprep.subr.mxu0 0.0
  %908 = vmatpush2.msra.mxu0 0.0
  %909 = vmatprep.subr.mxu0 0.0
  %910 = vmatpush2.msra.mxu0 0.0
  %911 = vmatprep.subr.mxu0 0.0
  %912 = vmatpush2.msra.mxu0 0.0
  %913 = vmatprep.subr.mxu0 0.0
  %914 = vmatpush2.msra.mxu0 0.0
  %915 = vmatprep.subr.mxu0 0.0
  %916 = vmatpush2.msra.mxu0 0.0
  %917 = vmatprep.subr.mxu0 0.0
  %918 = vmatpush2.msra.mxu0 0.0
  %919 = vmatprep.mubr.f32.mxu0 0.0
  %920 = vmatmul.mubr.f32.gmra.mxu0 %v853
  %v921 = vpop.f32.mrf.mxu0
  %v922 = vadd.f32 %v262, %v921
  %v923 = vpop.f32.mrf.mxu0
  %924 = vdwg.mxu0
  %v925 = vtanh.pop %v922
  %v926 = vsub.f32 %v925, %v766
  %v927 = vmul.f32 %v845, %v926
  %v928 = vadd.f32 %v766, %v927
  %v930 = vsel %vm284, %v928, 0
  %932 = vmatprep.subr.mxu0 0.0
  %933 = vmatpush1.msra.mxu0 0.0
  %934 = vmatprep.subr.mxu0 0.0
  %935 = vmatpush1.msra.mxu0 0.0
  %936 = vmatprep.subr.mxu0 0.0
  %937 = vmatpush1.msra.mxu0 0.0
  %938 = vmatprep.subr.mxu0 0.0
  %939 = vmatpush1.msra.mxu0 0.0
  %940 = vmatprep.subr.mxu0 0.0
  %941 = vmatpush1.msra.mxu0 0.0
  %942 = vmatprep.subr.mxu0 0.0
  %943 = vmatpush1.msra.mxu0 0.0
  %944 = vmatprep.subr.mxu0 0.0
  %945 = vmatpush1.msra.mxu0 0.0
  %946 = vmatprep.subr.mxu0 0.0
  %947 = vmatpush1.msra.mxu0 0.0
  %948 = vmatprep.subr.mxu0 0.0
  %949 = vmatpush1.msra.mxu0 0.0
  %950 = vmatprep.subr.mxu0 0.0
  %951 = vmatpush1.msra.mxu0 0.0
  %952 = vmatprep.subr.mxu0 0.0
  %953 = vmatpush1.msra.mxu0 0.0
  %954 = vmatprep.subr.mxu0 0.0
  %955 = vmatpush1.msra.mxu0 0.0
  %956 = vmatprep.subr.mxu0 0.0
  %957 = vmatpush1.msra.mxu0 0.0
  %958 = vmatprep.subr.mxu0 0.0
  %959 = vmatpush1.msra.mxu0 0.0
  %960 = vmatprep.subr.mxu0 0.0
  %961 = vmatpush1.msra.mxu0 %v281
  %962 = vmatprep.subr.mxu0 0.0
  %963 = vmatpush1.msra.mxu0 %v280
  %964 = vmatprep.subr.mxu0 0.0
  %965 = vmatpush2.msra.mxu0 0.0
  %966 = vmatprep.subr.mxu0 0.0
  %967 = vmatpush2.msra.mxu0 0.0
  %968 = vmatprep.subr.mxu0 0.0
  %969 = vmatpush2.msra.mxu0 0.0
  %970 = vmatprep.subr.mxu0 0.0
  %971 = vmatpush2.msra.mxu0 0.0
  %972 = vmatprep.subr.mxu0 0.0
  %973 = vmatpush2.msra.mxu0 0.0
  %974 = vmatprep.subr.mxu0 0.0
  %975 = vmatpush2.msra.mxu0 0.0
  %976 = vmatprep.subr.mxu0 0.0
  %977 = vmatpush2.msra.mxu0 0.0
  %978 = vmatprep.subr.mxu0 0.0
  %979 = vmatpush2.msra.mxu0 0.0
  %980 = vmatprep.subr.mxu0 0.0
  %981 = vmatpush2.msra.mxu0 0.0
  %982 = vmatprep.subr.mxu0 0.0
  %983 = vmatpush2.msra.mxu0 0.0
  %984 = vmatprep.subr.mxu0 0.0
  %985 = vmatpush2.msra.mxu0 0.0
  %986 = vmatprep.subr.mxu0 0.0
  %987 = vmatpush2.msra.mxu0 0.0
  %988 = vmatprep.subr.mxu0 0.0
  %989 = vmatpush2.msra.mxu0 0.0
  %990 = vmatprep.subr.mxu0 0.0
  %991 = vmatpush2.msra.mxu0 0.0
  %992 = vmatprep.subr.mxu0 0.0
  %993 = vmatpush2.msra.mxu0 0.0
  %994 = vmatprep.subr.mxu0 0.0
  %995 = vmatpush2.msra.mxu0 0.0
  %996 = vmatprep.mubr.f32.mxu0 0.0
  %997 = vmatmul.mubr.f32.gmra.mxu0 %v930
  %v998 = vpop.f32.mrf.mxu0
  %v999 = vadd.f32 %v164, %v998
  %v1000 = vpop.f32.mrf.mxu0
  %1001 = vdwg.mxu0
  %v1002 = vxor.u32 %v999, 2147483648
  %v1003 = vmul.f32 %v1002, 1.442695
  %v1004 = vpow.pop %v1003
  %v1005 = vadd.f32 %v1004, 1.0
  %v1006 = vrcp.pop %v1005
  %v1007 = vmul.f32 1.0, %v1006
  %1008 = vrot.lane.b32.xlu0 %v928, 16
  %v1009 = vpop.permute.xlu0 %1008
  %v1011 = vmul.f32 %v1007, %v1009
  %1013 = vrot.lane.b32.xlu0 %v1011, 112
  %v1014 = vpop.permute.xlu0 %1013
  %v1015 = vsel %vm284, %v1014, 0
  %1017 = vmatprep.subr.mxu0 0.0
  %1018 = vmatpush1.msra.mxu0 0.0
  %1019 = vmatprep.subr.mxu0 0.0
  %1020 = vmatpush1.msra.mxu0 0.0
  %1021 = vmatprep.subr.mxu0 0.0
  %1022 = vmatpush1.msra.mxu0 0.0
  %1023 = vmatprep.subr.mxu0 0.0
  %1024 = vmatpush1.msra.mxu0 0.0
  %1025 = vmatprep.subr.mxu0 0.0
  %1026 = vmatpush1.msra.mxu0 0.0
  %1027 = vmatprep.subr.mxu0 0.0
  %1028 = vmatpush1.msra.mxu0 0.0
  %1029 = vmatprep.subr.mxu0 0.0
  %1030 = vmatpush1.msra.mxu0 0.0
  %1031 = vmatprep.subr.mxu0 0.0
  %1032 = vmatpush1.msra.mxu0 0.0
  %1033 = vmatprep.subr.mxu0 0.0
  %1034 = vmatpush1.msra.mxu0 0.0
  %1035 = vmatprep.subr.mxu0 0.0
  %1036 = vmatpush1.msra.mxu0 0.0
  %1037 = vmatprep.subr.mxu0 0.0
  %1038 = vmatpush1.msra.mxu0 0.0
  %1039 = vmatprep.subr.mxu0 0.0
  %1040 = vmatpush1.msra.mxu0 0.0
  %1041 = vmatprep.subr.mxu0 0.0
  %1042 = vmatpush1.msra.mxu0 0.0
  %1043 = vmatprep.subr.mxu0 0.0
  %1044 = vmatpush1.msra.mxu0 0.0
  %1045 = vmatprep.subr.mxu0 0.0
  %1046 = vmatpush1.msra.mxu0 %v283
  %1047 = vmatprep.subr.mxu0 0.0
  %1048 = vmatpush1.msra.mxu0 %v282
  %1049 = vmatprep.subr.mxu0 0.0
  %1050 = vmatpush2.msra.mxu0 0.0
  %1051 = vmatprep.subr.mxu0 0.0
  %1052 = vmatpush2.msra.mxu0 0.0
  %1053 = vmatprep.subr.mxu0 0.0
  %1054 = vmatpush2.msra.mxu0 0.0
  %1055 = vmatprep.subr.mxu0 0.0
  %1056 = vmatpush2.msra.mxu0 0.0
  %1057 = vmatprep.subr.mxu0 0.0
  %1058 = vmatpush2.msra.mxu0 0.0
  %1059 = vmatprep.subr.mxu0 0.0
  %1060 = vmatpush2.msra.mxu0 0.0
  %1061 = vmatprep.subr.mxu0 0.0
  %1062 = vmatpush2.msra.mxu0 0.0
  %1063 = vmatprep.subr.mxu0 0.0
  %1064 = vmatpush2.msra.mxu0 0.0
  %1065 = vmatprep.subr.mxu0 0.0
  %1066 = vmatpush2.msra.mxu0 0.0
  %1067 = vmatprep.subr.mxu0 0.0
  %1068 = vmatpush2.msra.mxu0 0.0
  %1069 = vmatprep.subr.mxu0 0.0
  %1070 = vmatpush2.msra.mxu0 0.0
  %1071 = vmatprep.subr.mxu0 0.0
  %1072 = vmatpush2.msra.mxu0 0.0
  %1073 = vmatprep.subr.mxu0 0.0
  %1074 = vmatpush2.msra.mxu0 0.0
  %1075 = vmatprep.subr.mxu0 0.0
  %1076 = vmatpush2.msra.mxu0 0.0
  %1077 = vmatprep.subr.mxu0 0.0
  %1078 = vmatpush2.msra.mxu0 0.0
  %1079 = vmatprep.subr.mxu0 0.0
  %1080 = vmatpush2.msra.mxu0 0.0
  %1081 = vmatprep.mubr.f32.mxu0 0.0
  %1082 = vmatmul.mubr.f32.gmra.mxu0 %v1015
  %v1083 = vpop.f32.mrf.mxu0
  %v1084 = vadd.f32 %v267, %v1083
  %v1085 = vpop.f32.mrf.mxu0
  %1086 = vdwg.mxu0
  %v1087 = vtanh.pop %v1084
  %v1088 = vsub.f32 %v1087, %v928
  %v1089 = vmul.f32 %v1007, %v1088
  %v1090 = vadd.f32 %v928, %v1089
  %v1092 = vsel %vm284, %v1090, 0
  %1094 = vmatprep.subr.mxu0 0.0
  %1095 = vmatpush1.msra.mxu0 0.0
  %1096 = vmatprep.subr.mxu0 0.0
  %1097 = vmatpush1.msra.mxu0 0.0
  %1098 = vmatprep.subr.mxu0 0.0
  %1099 = vmatpush1.msra.mxu0 0.0
  %1100 = vmatprep.subr.mxu0 0.0
  %1101 = vmatpush1.msra.mxu0 0.0
  %1102 = vmatprep.subr.mxu0 0.0
  %1103 = vmatpush1.msra.mxu0 0.0
  %1104 = vmatprep.subr.mxu0 0.0
  %1105 = vmatpush1.msra.mxu0 0.0
  %1106 = vmatprep.subr.mxu0 0.0
  %1107 = vmatpush1.msra.mxu0 0.0
  %1108 = vmatprep.subr.mxu0 0.0
  %1109 = vmatpush1.msra.mxu0 0.0
  %1110 = vmatprep.subr.mxu0 0.0
  %1111 = vmatpush1.msra.mxu0 0.0
  %1112 = vmatprep.subr.mxu0 0.0
  %1113 = vmatpush1.msra.mxu0 0.0
  %1114 = vmatprep.subr.mxu0 0.0
  %1115 = vmatpush1.msra.mxu0 0.0
  %1116 = vmatprep.subr.mxu0 0.0
  %1117 = vmatpush1.msra.mxu0 0.0
  %1118 = vmatprep.subr.mxu0 0.0
  %1119 = vmatpush1.msra.mxu0 0.0
  %1120 = vmatprep.subr.mxu0 0.0
  %1121 = vmatpush1.msra.mxu0 0.0
  %1122 = vmatprep.subr.mxu0 0.0
  %1123 = vmatpush1.msra.mxu0 %v281
  %1124 = vmatprep.subr.mxu0 0.0
  %1125 = vmatpush1.msra.mxu0 %v280
  %1126 = vmatprep.subr.mxu0 0.0
  %1127 = vmatpush2.msra.mxu0 0.0
  %1128 = vmatprep.subr.mxu0 0.0
  %1129 = vmatpush2.msra.mxu0 0.0
  %1130 = vmatprep.subr.mxu0 0.0
  %1131 = vmatpush2.msra.mxu0 0.0
  %1132 = vmatprep.subr.mxu0 0.0
  %1133 = vmatpush2.msra.mxu0 0.0
  %1134 = vmatprep.subr.mxu0 0.0
  %1135 = vmatpush2.msra.mxu0 0.0
  %1136 = vmatprep.subr.mxu0 0.0
  %1137 = vmatpush2.msra.mxu0 0.0
  %1138 = vmatprep.subr.mxu0 0.0
  %1139 = vmatpush2.msra.mxu0 0.0
  %1140 = vmatprep.subr.mxu0 0.0
  %1141 = vmatpush2.msra.mxu0 0.0
  %1142 = vmatprep.subr.mxu0 0.0
  %1143 = vmatpush2.msra.mxu0 0.0
  %1144 = vmatprep.subr.mxu0 0.0
  %1145 = vmatpush2.msra.mxu0 0.0
  %1146 = vmatprep.subr.mxu0 0.0
  %1147 = vmatpush2.msra.mxu0 0.0
  %1148 = vmatprep.subr.mxu0 0.0
  %1149 = vmatpush2.msra.mxu0 0.0
  %1150 = vmatprep.subr.mxu0 0.0
  %1151 = vmatpush2.msra.mxu0 0.0
  %1152 = vmatprep.subr.mxu0 0.0
  %1153 = vmatpush2.msra.mxu0 0.0
  %1154 = vmatprep.subr.mxu0 0.0
  %1155 = vmatpush2.msra.mxu0 0.0
  %1156 = vmatprep.subr.mxu0 0.0
  %1157 = vmatpush2.msra.mxu0 0.0
  %1158 = vmatprep.mubr.f32.mxu0 0.0
  %1159 = vmatmul.mubr.f32.gmra.mxu0 %v1092
  %v1160 = vpop.f32.mrf.mxu0
  %v1161 = vadd.f32 %v167, %v1160
  %v1162 = vpop.f32.mrf.mxu0
  %1163 = vdwg.mxu0
  %v1164 = vxor.u32 %v1161, 2147483648
  %v1165 = vmul.f32 %v1164, 1.442695
  %v1166 = vpow.pop %v1165
  %v1167 = vadd.f32 %v1166, 1.0
  %v1168 = vrcp.pop %v1167
  %v1169 = vmul.f32 1.0, %v1168
  %1170 = vrot.lane.b32.xlu0 %v1090, 16
  %v1171 = vpop.permute.xlu0 %1170
  %v1173 = vmul.f32 %v1169, %v1171
  %1175 = vrot.lane.b32.xlu0 %v1173, 112
  %v1176 = vpop.permute.xlu0 %1175
  %v1177 = vsel %vm284, %v1176, 0
  %1179 = vmatprep.subr.mxu0 0.0
  %1180 = vmatpush1.msra.mxu0 0.0
  %1181 = vmatprep.subr.mxu0 0.0
  %1182 = vmatpush1.msra.mxu0 0.0
  %1183 = vmatprep.subr.mxu0 0.0
  %1184 = vmatpush1.msra.mxu0 0.0
  %1185 = vmatprep.subr.mxu0 0.0
  %1186 = vmatpush1.msra.mxu0 0.0
  %1187 = vmatprep.subr.mxu0 0.0
  %1188 = vmatpush1.msra.mxu0 0.0
  %1189 = vmatprep.subr.mxu0 0.0
  %1190 = vmatpush1.msra.mxu0 0.0
  %1191 = vmatprep.subr.mxu0 0.0
  %1192 = vmatpush1.msra.mxu0 0.0
  %1193 = vmatprep.subr.mxu0 0.0
  %1194 = vmatpush1.msra.mxu0 0.0
  %1195 = vmatprep.subr.mxu0 0.0
  %1196 = vmatpush1.msra.mxu0 0.0
  %1197 = vmatprep.subr.mxu0 0.0
  %1198 = vmatpush1.msra.mxu0 0.0
  %1199 = vmatprep.subr.mxu0 0.0
  %1200 = vmatpush1.msra.mxu0 0.0
  %1201 = vmatprep.subr.mxu0 0.0
  %1202 = vmatpush1.msra.mxu0 0.0
  %1203 = vmatprep.subr.mxu0 0.0
  %1204 = vmatpush1.msra.mxu0 0.0
  %1205 = vmatprep.subr.mxu0 0.0
  %1206 = vmatpush1.msra.mxu0 0.0
  %1207 = vmatprep.subr.mxu0 0.0
  %1208 = vmatpush1.msra.mxu0 %v283
  %1209 = vmatprep.subr.mxu0 0.0
  %1210 = vmatpush1.msra.mxu0 %v282
  %1211 = vmatprep.subr.mxu0 0.0
  %1212 = vmatpush2.msra.mxu0 0.0
  %1213 = vmatprep.subr.mxu0 0.0
  %1214 = vmatpush2.msra.mxu0 0.0
  %1215 = vmatprep.subr.mxu0 0.0
  %1216 = vmatpush2.msra.mxu0 0.0
  %1217 = vmatprep.subr.mxu0 0.0
  %1218 = vmatpush2.msra.mxu0 0.0
  %1219 = vmatprep.subr.mxu0 0.0
  %1220 = vmatpush2.msra.mxu0 0.0
  %1221 = vmatprep.subr.mxu0 0.0
  %1222 = vmatpush2.msra.mxu0 0.0
  %1223 = vmatprep.subr.mxu0 0.0
  %1224 = vmatpush2.msra.mxu0 0.0
  %1225 = vmatprep.subr.mxu0 0.0
  %1226 = vmatpush2.msra.mxu0 0.0
  %1227 = vmatprep.subr.mxu0 0.0
  %1228 = vmatpush2.msra.mxu0 0.0
  %1229 = vmatprep.subr.mxu0 0.0
  %1230 = vmatpush2.msra.mxu0 0.0
  %1231 = vmatprep.subr.mxu0 0.0
  %1232 = vmatpush2.msra.mxu0 0.0
  %1233 = vmatprep.subr.mxu0 0.0
  %1234 = vmatpush2.msra.mxu0 0.0
  %1235 = vmatprep.subr.mxu0 0.0
  %1236 = vmatpush2.msra.mxu0 0.0
  %1237 = vmatprep.subr.mxu0 0.0
  %1238 = vmatpush2.msra.mxu0 0.0
  %1239 = vmatprep.subr.mxu0 0.0
  %1240 = vmatpush2.msra.mxu0 0.0
  %1241 = vmatprep.subr.mxu0 0.0
  %1242 = vmatpush2.msra.mxu0 0.0
  %1243 = vmatprep.mubr.f32.mxu0 0.0
  %1244 = vmatmul.mubr.f32.gmra.mxu0 %v1177
  %v1245 = vpop.f32.mrf.mxu0
  %v1246 = vadd.f32 %v270, %v1245
  %v1247 = vpop.f32.mrf.mxu0
  %1248 = vdwg.mxu0
  %v1249 = vtanh.pop %v1246
  %v1250 = vsub.f32 %v1249, %v1090
  %v1251 = vmul.f32 %v1169, %v1250
  %v1252 = vadd.f32 %v1090, %v1251
  %v1254 = vsel %vm284, %v1252, 0
  %1256 = vmatprep.subr.mxu0 0.0
  %1257 = vmatpush1.msra.mxu0 0.0
  %1258 = vmatprep.subr.mxu0 0.0
  %1259 = vmatpush1.msra.mxu0 0.0
  %1260 = vmatprep.subr.mxu0 0.0
  %1261 = vmatpush1.msra.mxu0 0.0
  %1262 = vmatprep.subr.mxu0 0.0
  %1263 = vmatpush1.msra.mxu0 0.0
  %1264 = vmatprep.subr.mxu0 0.0
  %1265 = vmatpush1.msra.mxu0 0.0
  %1266 = vmatprep.subr.mxu0 0.0
  %1267 = vmatpush1.msra.mxu0 0.0
  %1268 = vmatprep.subr.mxu0 0.0
  %1269 = vmatpush1.msra.mxu0 0.0
  %1270 = vmatprep.subr.mxu0 0.0
  %1271 = vmatpush1.msra.mxu0 0.0
  %1272 = vmatprep.subr.mxu0 0.0
  %1273 = vmatpush1.msra.mxu0 0.0
  %1274 = vmatprep.subr.mxu0 0.0
  %1275 = vmatpush1.msra.mxu0 0.0
  %1276 = vmatprep.subr.mxu0 0.0
  %1277 = vmatpush1.msra.mxu0 0.0
  %1278 = vmatprep.subr.mxu0 0.0
  %1279 = vmatpush1.msra.mxu0 0.0
  %1280 = vmatprep.subr.mxu0 0.0
  %1281 = vmatpush1.msra.mxu0 0.0
  %1282 = vmatprep.subr.mxu0 0.0
  %1283 = vmatpush1.msra.mxu0 0.0
  %1284 = vmatprep.subr.mxu0 0.0
  %1285 = vmatpush1.msra.mxu0 %v281
  %1286 = vmatprep.subr.mxu0 0.0
  %1287 = vmatpush1.msra.mxu0 %v280
  %1288 = vmatprep.subr.mxu0 0.0
  %1289 = vmatpush2.msra.mxu0 0.0
  %1290 = vmatprep.subr.mxu0 0.0
  %1291 = vmatpush2.msra.mxu0 0.0
  %1292 = vmatprep.subr.mxu0 0.0
  %1293 = vmatpush2.msra.mxu0 0.0
  %1294 = vmatprep.subr.mxu0 0.0
  %1295 = vmatpush2.msra.mxu0 0.0
  %1296 = vmatprep.subr.mxu0 0.0
  %1297 = vmatpush2.msra.mxu0 0.0
  %1298 = vmatprep.subr.mxu0 0.0
  %1299 = vmatpush2.msra.mxu0 0.0
  %1300 = vmatprep.subr.mxu0 0.0
  %1301 = vmatpush2.msra.mxu0 0.0
  %1302 = vmatprep.subr.mxu0 0.0
  %1303 = vmatpush2.msra.mxu0 0.0
  %1304 = vmatprep.subr.mxu0 0.0
  %1305 = vmatpush2.msra.mxu0 0.0
  %1306 = vmatprep.subr.mxu0 0.0
  %1307 = vmatpush2.msra.mxu0 0.0
  %1308 = vmatprep.subr.mxu0 0.0
  %1309 = vmatpush2.msra.mxu0 0.0
  %1310 = vmatprep.subr.mxu0 0.0
  %1311 = vmatpush2.msra.mxu0 0.0
  %1312 = vmatprep.subr.mxu0 0.0
  %1313 = vmatpush2.msra.mxu0 0.0
  %1314 = vmatprep.subr.mxu0 0.0
  %1315 = vmatpush2.msra.mxu0 0.0
  %1316 = vmatprep.subr.mxu0 0.0
  %1317 = vmatpush2.msra.mxu0 0.0
  %1318 = vmatprep.subr.mxu0 0.0
  %1319 = vmatpush2.msra.mxu0 0.0
  %1320 = vmatprep.mubr.f32.mxu0 0.0
  %1321 = vmatmul.mubr.f32.gmra.mxu0 %v1254
  %v1322 = vpop.f32.mrf.mxu0
  %v1323 = vadd.f32 %v172, %v1322
  %v1324 = vpop.f32.mrf.mxu0
  %1325 = vdwg.mxu0
  %v1326 = vxor.u32 %v1323, 2147483648
  %v1327 = vmul.f32 %v1326, 1.442695
  %v1328 = vpow.pop %v1327
  %v1329 = vadd.f32 %v1328, 1.0
  %v1330 = vrcp.pop %v1329
  %v1331 = vmul.f32 1.0, %v1330
  %1332 = vrot.lane.b32.xlu0 %v1252, 16
  %v1333 = vpop.permute.xlu0 %1332
  %v1335 = vmul.f32 %v1331, %v1333
  %1337 = vrot.lane.b32.xlu0 %v1335, 112
  %v1338 = vpop.permute.xlu0 %1337
  %v1339 = vsel %vm284, %v1338, 0
  %1341 = vmatprep.subr.mxu0 0.0
  %1342 = vmatpush1.msra.mxu0 0.0
  %1343 = vmatprep.subr.mxu0 0.0
  %1344 = vmatpush1.msra.mxu0 0.0
  %1345 = vmatprep.subr.mxu0 0.0
  %1346 = vmatpush1.msra.mxu0 0.0
  %1347 = vmatprep.subr.mxu0 0.0
  %1348 = vmatpush1.msra.mxu0 0.0
  %1349 = vmatprep.subr.mxu0 0.0
  %1350 = vmatpush1.msra.mxu0 0.0
  %1351 = vmatprep.subr.mxu0 0.0
  %1352 = vmatpush1.msra.mxu0 0.0
  %1353 = vmatprep.subr.mxu0 0.0
  %1354 = vmatpush1.msra.mxu0 0.0
  %1355 = vmatprep.subr.mxu0 0.0
  %1356 = vmatpush1.msra.mxu0 0.0
  %1357 = vmatprep.subr.mxu0 0.0
  %1358 = vmatpush1.msra.mxu0 0.0
  %1359 = vmatprep.subr.mxu0 0.0
  %1360 = vmatpush1.msra.mxu0 0.0
  %1361 = vmatprep.subr.mxu0 0.0
  %1362 = vmatpush1.msra.mxu0 0.0
  %1363 = vmatprep.subr.mxu0 0.0
  %1364 = vmatpush1.msra.mxu0 0.0
  %1365 = vmatprep.subr.mxu0 0.0
  %1366 = vmatpush1.msra.mxu0 0.0
  %1367 = vmatprep.subr.mxu0 0.0
  %1368 = vmatpush1.msra.mxu0 0.0
  %1369 = vmatprep.subr.mxu0 0.0
  %1370 = vmatpush1.msra.mxu0 %v283
  %1371 = vmatprep.subr.mxu0 0.0
  %1372 = vmatpush1.msra.mxu0 %v282
  %1373 = vmatprep.subr.mxu0 0.0
  %1374 = vmatpush2.msra.mxu0 0.0
  %1375 = vmatprep.subr.mxu0 0.0
  %1376 = vmatpush2.msra.mxu0 0.0
  %1377 = vmatprep.subr.mxu0 0.0
  %1378 = vmatpush2.msra.mxu0 0.0
  %1379 = vmatprep.subr.mxu0 0.0
  %1380 = vmatpush2.msra.mxu0 0.0
  %1381 = vmatprep.subr.mxu0 0.0
  %1382 = vmatpush2.msra.mxu0 0.0
  %1383 = vmatprep.subr.mxu0 0.0
  %1384 = vmatpush2.msra.mxu0 0.0
  %1385 = vmatprep.subr.mxu0 0.0
  %1386 = vmatpush2.msra.mxu0 0.0
  %1387 = vmatprep.subr.mxu0 0.0
  %1388 = vmatpush2.msra.mxu0 0.0
  %1389 = vmatprep.subr.mxu0 0.0
  %1390 = vmatpush2.msra.mxu0 0.0
  %1391 = vmatprep.subr.mxu0 0.0
  %1392 = vmatpush2.msra.mxu0 0.0
  %1393 = vmatprep.subr.mxu0 0.0
  %1394 = vmatpush2.msra.mxu0 0.0
  %1395 = vmatprep.subr.mxu0 0.0
  %1396 = vmatpush2.msra.mxu0 0.0
  %1397 = vmatprep.subr.mxu0 0.0
  %1398 = vmatpush2.msra.mxu0 0.0
  %1399 = vmatprep.subr.mxu0 0.0
  %1400 = vmatpush2.msra.mxu0 0.0
  %1401 = vmatprep.subr.mxu0 0.0
  %1402 = vmatpush2.msra.mxu0 0.0
  %1403 = vmatprep.subr.mxu0 0.0
  %1404 = vmatpush2.msra.mxu0 0.0
  %1405 = vmatprep.mubr.f32.mxu0 0.0
  %1406 = vmatmul.mubr.f32.gmra.mxu0 %v1339
  %v1407 = vpop.f32.mrf.mxu0
  %v1408 = vadd.f32 %v275, %v1407
  %v1409 = vpop.f32.mrf.mxu0
  %1410 = vdwg.mxu0
  %v1411 = vtanh.pop %v1408
  %v1412 = vsub.f32 %v1411, %v1252
  %v1413 = vmul.f32 %v1331, %v1412
  %v1414 = vadd.f32 %v1252, %v1413
  %v1415 = vlaneseq
  %v1416 = vand.u32 %v1415, 127
  %vm1417 = vcmp.lt.s32.totalorder %v1416, 8
  %v1418 = vsel %vm1417, 0.0, %v1414
  %v1419 = vsel %vm1417, %v442, %v1252
  %v1420 = vsel %vm1417, %v604, %v1090
  %v1421 = vsel %vm1417, %v766, %v928
  %v1422 = vsel %vm1417, %v928, %v766
  %v1423 = vsel %vm1417, %v1090, %v604
  %v1424 = vsel %vm1417, %v1252, %v442
  %v1425 = vsel %vm1417, %v1414, 0.0
  %v1426 = vpack.c.bf16 %v1419, %v1418
  %v1427 = vpack.c.bf16 %v1421, %v1420
  %v1428 = vpack.c.bf16 %v1423, %v1422
  %v1429 = vpack.c.bf16 %v1425, %v1424
  %v1430 = vld [vmem:[%s7] sm:$0xf]
  %v1431 = vld [vmem:[%s7 + $0x4] sm:$0xf]
  %v1432 = vld [vmem:[%s8] sm:$0x1]
  %v1434 = vlaneseq
  %v1435 = vshrl.u32 %v1434, 7
  %v1436 = vsub.s32 0, %v1435
  %v1437 = vrot.slane %v1432, %v1436
  %v1441 = vunpack.c.l.b16 %v1430
  %v1442 = vunpack.c.l.b16 %v1431
  %v1443 = vpack.c.b16 %v1442, %v1441
  %v1446 = vsel %vm284, %v1426, 0
  %v1449 = vsel %vm284, %v1427, 0
  %v1452 = vsel %vm284, %v1428, 0
  %v1455 = vsel %vm284, %v1429, 0
  %1457 = vmatprep.subr.bf16.mxu0 0
  %1458 = vmatpush1.bf16.msra.mxu0 0
  %1459 = vmatprep.subr.bf16.mxu0 0
  %1460 = vmatpush1.bf16.msra.mxu0 0
  %1461 = vmatprep.subr.bf16.mxu0 0
  %1462 = vmatpush1.bf16.msra.mxu0 0
  %1463 = vmatprep.subr.bf16.mxu0 0
  %1464 = vmatpush1.bf16.msra.mxu0 0
  %1465 = vmatprep.subr.bf16.mxu0 0
  %1466 = vmatpush1.bf16.msra.mxu0 0
  %1467 = vmatprep.subr.bf16.mxu0 0
  %1468 = vmatpush1.bf16.msra.mxu0 0
  %1469 = vmatprep.subr.bf16.mxu0 0
  %1470 = vmatpush1.bf16.msra.mxu0 0
  %1471 = vmatprep.subr.bf16.mxu0 0
  %1472 = vmatpush1.bf16.msra.mxu0 %v1443
  %1473 = vmatprep.subr.bf16.mxu0 0
  %1474 = vmatpush2.bf16.msra.mxu0 0
  %1475 = vmatprep.subr.bf16.mxu0 0
  %1476 = vmatpush2.bf16.msra.mxu0 0
  %1477 = vmatprep.subr.bf16.mxu0 0
  %1478 = vmatpush2.bf16.msra.mxu0 0
  %1479 = vmatprep.subr.bf16.mxu0 0
  %1480 = vmatpush2.bf16.msra.mxu0 0
  %1481 = vmatprep.subr.bf16.mxu0 0
  %1482 = vmatpush2.bf16.msra.mxu0 0
  %1483 = vmatprep.subr.bf16.mxu0 0
  %1484 = vmatpush2.bf16.msra.mxu0 0
  %1485 = vmatprep.subr.bf16.mxu0 0
  %1486 = vmatpush2.bf16.msra.mxu0 0
  %1487 = vmatprep.subr.bf16.mxu0 0
  %1488 = vmatpush2.bf16.msra.mxu0 0
  %1489 = vmatprep.mubr.bf16.mxu0 0
  %1490 = vmatmul.mubr.bf16.gmra.mxu0 %v1446
  %v1491 = vpop.f32.mrf.mxu0
  %v1492 = vadd.f32 %v1437, %v1491
  %v1493 = vpop.f32.mrf.mxu0
  %v1494 = vpop.f32.mrf.mxu0
  %v1495 = vadd.f32 %v1437, %v1494
  %v1496 = vpop.f32.mrf.mxu0
  %1497 = vmatprep.mubr.bf16.mxu0 0
  %1498 = vmatmul.mubr.bf16.gmra.mxu0 %v1449
  %v1499 = vpop.f32.mrf.mxu0
  %v1500 = vadd.f32 %v1437, %v1499
  %v1501 = vpop.f32.mrf.mxu0
  %v1502 = vpop.f32.mrf.mxu0
  %v1503 = vadd.f32 %v1437, %v1502
  %v1504 = vpop.f32.mrf.mxu0
  %1505 = vmatprep.mubr.bf16.mxu0 0
  %1506 = vmatmul.mubr.bf16.gmra.mxu0 %v1452
  %v1507 = vpop.f32.mrf.mxu0
  %v1508 = vadd.f32 %v1437, %v1507
  %v1509 = vpop.f32.mrf.mxu0
  %v1510 = vpop.f32.mrf.mxu0
  %v1511 = vadd.f32 %v1437, %v1510
  %v1512 = vpop.f32.mrf.mxu0
  %1513 = vmatprep.mubr.bf16.mxu0 0
  %1514 = vmatmul.mubr.bf16.gmra.mxu0 %v1455
  %v1515 = vpop.f32.mrf.mxu0
  %v1516 = vadd.f32 %v1437, %v1515
  %v1517 = vpop.f32.mrf.mxu0
  %v1518 = vpop.f32.mrf.mxu0
  %v1519 = vadd.f32 %v1437, %v1518
  %v1520 = vpop.f32.mrf.mxu0
  %1521 = vdwg.mxu0
  %1522 = vmax.xlane.f32.xlu0 %v1492
  %v1523 = vpop.xlane.xlu0 %1522
  %1524 = vmax.xlane.f32.xlu0 %v1495
  %v1525 = vpop.xlane.xlu0 %1524
  %1526 = vmax.xlane.f32.xlu0 %v1500
  %v1527 = vpop.xlane.xlu0 %1526
  %1528 = vmax.xlane.f32.xlu0 %v1503
  %v1529 = vpop.xlane.xlu0 %1528
  %1530 = vmax.xlane.f32.xlu0 %v1508
  %v1531 = vpop.xlane.xlu0 %1530
  %1532 = vmax.xlane.f32.xlu0 %v1511
  %v1533 = vpop.xlane.xlu0 %1532
  %1534 = vmax.xlane.f32.xlu0 %v1516
  %v1535 = vpop.xlane.xlu0 %1534
  %1536 = vmax.xlane.f32.xlu0 %v1519
  %v1537 = vpop.xlane.xlu0 %1536
  %v1538 = vsub.f32 %v1492, %v1523
  %v1539 = vsub.f32 %v1495, %v1525
  %v1540 = vsub.f32 %v1500, %v1527
  %v1541 = vsub.f32 %v1503, %v1529
  %v1542 = vsub.f32 %v1508, %v1531
  %v1543 = vsub.f32 %v1511, %v1533
  %v1544 = vsub.f32 %v1516, %v1535
  %v1545 = vsub.f32 %v1519, %v1537
  %v1546 = vmul.f32 %v1538, 1.442695
  %v1547 = vpow.pop %v1546
  %v1548 = vmul.f32 %v1539, 1.442695
  %v1549 = vpow.pop %v1548
  %v1550 = vmul.f32 %v1540, 1.442695
  %v1551 = vpow.pop %v1550
  %v1552 = vmul.f32 %v1541, 1.442695
  %v1553 = vpow.pop %v1552
  %v1554 = vmul.f32 %v1542, 1.442695
  %v1555 = vpow.pop %v1554
  %v1556 = vmul.f32 %v1543, 1.442695
  %v1557 = vpow.pop %v1556
  %v1558 = vmul.f32 %v1544, 1.442695
  %v1559 = vpow.pop %v1558
  %v1560 = vmul.f32 %v1545, 1.442695
  %v1561 = vpow.pop %v1560
  %1562 = vadd.xlane.f32.xlu0 %v1547
  %v1563 = vpop.xlane.xlu0 %1562
  %1564 = vadd.xlane.f32.xlu0 %v1549
  %v1565 = vpop.xlane.xlu0 %1564
  %1566 = vadd.xlane.f32.xlu0 %v1551
  %v1567 = vpop.xlane.xlu0 %1566
  %1568 = vadd.xlane.f32.xlu0 %v1553
  %v1569 = vpop.xlane.xlu0 %1568
  %1570 = vadd.xlane.f32.xlu0 %v1555
  %v1571 = vpop.xlane.xlu0 %1570
  %1572 = vadd.xlane.f32.xlu0 %v1557
  %v1573 = vpop.xlane.xlu0 %1572
  %1574 = vadd.xlane.f32.xlu0 %v1559
  %v1575 = vpop.xlane.xlu0 %1574
  %1576 = vadd.xlane.f32.xlu0 %v1561
  %v1577 = vpop.xlane.xlu0 %1576
  %v1578 = vlog2.pop %v1563
  %v1579 = vmul.f32 %v1578, 0.6931472
  %v1580 = vlog2.pop %v1565
  %v1581 = vmul.f32 %v1580, 0.6931472
  %v1582 = vlog2.pop %v1567
  %v1583 = vmul.f32 %v1582, 0.6931472
  %v1584 = vlog2.pop %v1569
  %v1585 = vmul.f32 %v1584, 0.6931472
  %v1586 = vlog2.pop %v1571
  %v1587 = vmul.f32 %v1586, 0.6931472
  %v1588 = vlog2.pop %v1573
  %v1589 = vmul.f32 %v1588, 0.6931472
  %v1590 = vlog2.pop %v1575
  %v1591 = vmul.f32 %v1590, 0.6931472
  %v1592 = vlog2.pop %v1577
  %v1593 = vmul.f32 %v1592, 0.6931472
  %v1594 = vadd.f32 %v1523, %v1579
  %v1595 = vadd.f32 %v1525, %v1581
  %v1596 = vadd.f32 %v1527, %v1583
  %v1597 = vadd.f32 %v1529, %v1585
  %v1598 = vadd.f32 %v1531, %v1587
  %v1599 = vadd.f32 %v1533, %v1589
  %v1600 = vadd.f32 %v1535, %v1591
  %v1601 = vadd.f32 %v1537, %v1593
  %v1602 = vsub.f32 %v1492, %v1594
  %v1603 = vsub.f32 %v1495, %v1595
  %v1604 = vsub.f32 %v1500, %v1596
  %v1605 = vsub.f32 %v1503, %v1597
  %v1606 = vsub.f32 %v1508, %v1598
  %v1607 = vsub.f32 %v1511, %v1599
  %v1608 = vsub.f32 %v1516, %v1600
  %v1609 = vsub.f32 %v1519, %v1601
  %1610 = vst [vmem:[%s9] sm:$0xff] %v1602
  %1611 = vst [vmem:[%s9 + $0x8] sm:$0xff] %v1603
  %1612 = vst [vmem:[%s9 + $0x10] sm:$0xff] %v1604
  %1613 = vst [vmem:[%s9 + $0x18] sm:$0xff] %v1605
  %1614 = vst [vmem:[%s9 + $0x20] sm:$0xff] %v1606
  %1615 = vst [vmem:[%s9 + $0x28] sm:$0xff] %v1607
  %1616 = vst [vmem:[%s9 + $0x30] sm:$0xff] %v1608
  %1617 = vst [vmem:[%s9 + $0x38] sm:$0xff] %v1609
  // Predicated region
  $region38: #{bigru_forward.1} parent=0 // pred_check
    _
  $region39: #{bigru_forward.1} parent=0 // pred_check_branch
    %1619 = sbr.rel (0) target = $region41
  $region40: #{bigru_forward.1} parent=0 // pred_region
    _
  $region41: #{bigru_forward.1} parent=0 // pred_fallthru
    _
  // Predicated region
  $region42: #{bigru_forward.1} parent=0 // pred_check
    _
  $region43: #{bigru_forward.1} parent=0 // pred_check_branch
    %1621 = sbr.rel (0) target = $region45
  $region44: #{bigru_forward.1} parent=0 // pred_region
    _
  $region45: #{bigru_forward.1} parent=0 // pred_fallthru
    _

</llo_original>
